<compile_context>
chip_gen: v5e
topology: v5e:2x2
jax: 0.10.0
libtpu: 0.0.40
codegen_flags: <defaults>
</compile_context>

<pallas_src>
import functools

import jax
import jax.numpy as jnp
from jax.experimental import pallas as pl
from jax.experimental.pallas import tpu as pltpu

# ---------------- synthetic "cfg" (deterministic, in-script) ----------------
NUM_CLASSES = 4
FOCAL_ALPHA = 0.25
FOCAL_GAMMA = 2.0
INS_LOSS_WEIGHT = 1.0      # cfg.dice_weight
CONF_LOSS_WEIGHT = 1.0     # cfg.focal_weight
LAVA_LOSS_WEIGHT = 1.0     # cfg.lava_weight (loss discarded by the reference)
EDGE_LOSS_WEIGHT = 2.0
NUM_GRIDS = (8, 6)         # two FPN levels


def _vmem():
    return pl.BlockSpec(memory_space=pltpu.MemorySpace.VMEM)


def _smem():
    return pl.BlockSpec(memory_space=pltpu.MemorySpace.SMEM)


# ----------------------------- Pallas kernels -------------------------------
def _fused_conv_dice_edge_kernel(k_ref, m_ref, t_ref,
                                 dice_ref, se_ref, cnt_ref,
                                 pad_x, pad_t):
    """Fused per-(level, image) instance losses.

    k_ref : (I, E) f32 in SMEM   gathered dynamic-conv kernels
    m_ref : (E, H, W) f32        mask feature map of this image
    t_ref : (I, H, W) uint8      instance GT masks
    outputs: dice sum over instances, edge squared-error sum, edge mask count
    pad_x / pad_t : (H+2, W+2) f32 scratch for the zero-padded Laplacian.
    """
    I, E = k_ref.shape
    _, H, W = m_ref.shape

    m = m_ref[...]                                # (E, H, W), loaded once

    # zero the 1-pixel Laplacian border once; interiors are overwritten below
    pad_x[...] = jnp.zeros_like(pad_x)
    pad_t[...] = jnp.zeros_like(pad_t)

    def lap9(p_ref):
        # 3x3 Laplacian (center 8, neighbours -1) on a zero-padded map.
        p = p_ref[...]
        acc = jnp.zeros((H, W), jnp.float32)
        for dy in range(3):
            for dx in range(3):
                acc = acc + p[dy:dy + H, dx:dx + W]
        return 9.0 * p[1:1 + H, 1:1 + W] - acc

    dice_sum = jnp.float32(0.0)
    se_sum = jnp.float32(0.0)
    cnt_sum = jnp.float32(0.0)

    for i in range(I):                            # static unroll, I is small
        # SOLOv2 dynamic 1x1 conv for instance i: unrolled scalar*vector MAC
        # on the VPU (kernel scalars read from SMEM; no MXU fill/drain).
        acc = k_ref[i, 0] * m[0]
        for e in range(1, E):
            acc = acc + k_ref[i, e] * m[e]
        sig = jax.nn.sigmoid(acc)                 # single sigmoid, stays in VMEM
        tgt = t_ref[i].astype(jnp.float32)        # uint8 -> f32 in-register

        # ---- dice loss (per instance) ----
        a = jnp.sum(sig * tgt)
        b = jnp.sum(sig * sig) + 0.001
        c = jnp.sum(tgt * tgt) + 0.001
        dice_sum = dice_sum + (1.0 - 2.0 * a / (b + c))

        # ---- edge loss terms (3x3 Laplacian, zero padding = 1) ----
        pad_x[1:1 + H, 1:1 + W] = sig
        pad_t[1:1 + H, 1:1 + W] = tgt
        ib = jnp.abs(lap9(pad_x))
        tb = jnp.abs(lap9(pad_t))
        msk = (ib >= 0.5).astype(jnp.float32)
        diff = ib - tb
        se_sum = se_sum + jnp.sum(msk * diff * diff)
        cnt_sum = cnt_sum + jnp.sum(msk)

    dice_ref[...] = jnp.broadcast_to(dice_sum, (1, 1))
    se_ref[...] = jnp.broadcast_to(se_sum, (1, 1))
    cnt_ref[...] = jnp.broadcast_to(cnt_sum, (1, 1))


def _focal_kernel(x_ref, lbl_ref, o_ref, *, num_classes, alpha, gamma):
    """Sigmoid focal loss (sum reduction) on a lane-dense (C, N) layout.

    x_ref   : (C, N) f32 logits
    lbl_ref : (1, N) int32 class labels (== num_classes for background)
    One-hot target is built in-kernel (no f32 one-hot DMA).
    """
    x = x_ref[...]
    lbl = lbl_ref[...]
    C, N = x.shape
    cls = jax.lax.broadcasted_iota(jnp.int32, (C, N), 0)
    t = jnp.where((lbl == cls) & (lbl != num_classes), 1.0, 0.0)

    p = jax.nn.sigmoid(x)
    # numerically stable BCE-with-logits
    ce = jnp.maximum(x, 0.0) - x * t + jnp.log(1.0 + jnp.exp(-jnp.abs(x)))
    p_t = p * t + (1.0 - p) * (1.0 - t)
    one_m = 1.0 - p_t
    if float(gamma) == 2.0:        # explicit square: avoids pow -> exp/log
        mod = one_m * one_m
    else:
        mod = one_m ** gamma
    loss = ce * mod
    if alpha >= 0:
        loss = (alpha * t + (1.0 - alpha) * (1.0 - t)) * loss
    o_ref[...] = jnp.broadcast_to(jnp.sum(loss), (1, 1))


# ----------------------------- kernel wrappers -------------------------------
def fused_instance_losses(kernel_ie, mask_feat, target_u8):
    """Returns (dice_sum, edge_se_sum, edge_count) for one (level, image)."""
    H, W = mask_feat.shape[-2:]
    dice, se, cnt = pl.pallas_call(
        _fused_conv_dice_edge_kernel,
        out_shape=(jax.ShapeDtypeStruct((1, 1), jnp.float32),) * 3,
        in_specs=[_smem(), _vmem(), _vmem()],
        out_specs=(_vmem(), _vmem(), _vmem()),
        scratch_shapes=[pltpu.VMEM((H + 2, W + 2), jnp.float32),
                        pltpu.VMEM((H + 2, W + 2), jnp.float32)],
    )(kernel_ie, mask_feat, target_u8)
    return dice[0, 0], se[0, 0], cnt[0, 0]


def focal_loss_sum(logits_cn, labels_1n, num_classes, alpha, gamma):
    out = pl.pallas_call(
        functools.partial(_focal_kernel, num_classes=num_classes,
                          alpha=alpha, gamma=gamma),
        out_shape=jax.ShapeDtypeStruct((1, 1), jnp.float32),
        in_specs=[_vmem(), _vmem()],
        out_specs=_vmem(),
    )(logits_cn, labels_1n)
    return out[0, 0]


# ----------------------------- full forward ---------------------------------
def plane_rec_net_loss_forward(mask_preds, cate_preds, kernel_preds,
                               gt_struct, gt_depths, gt_edges):
    """gt_struct: per-image (ins_label_list, cate_label_list,
                             ins_ind_label_list, grid_order_list).
    # TODO(synk): prepare_ground_truth (cv2 imrescale, numpy, data-dependent
    # shapes) is replaced by a precomputed static synthetic ground truth.
    gt_depths / gt_edges are only consumed by branches the torch reference
    discards ('lav' is hard-set to 0; DiceLoss ignores its `edge` argument),
    so no compute is emitted for them.
    """
    B, E, Hm, Wm = mask_preds.shape
    num_levels = len(cate_preds)

    ins_label_list = [g[0] for g in gt_struct]
    cate_label_list = [g[1] for g in gt_struct]
    ins_ind_label_list = [g[2] for g in gt_struct]
    grid_order_list = [g[3] for g in gt_struct]

    losses = {}

    # ---- fused dynamic-conv + sigmoid + dice + edge (one call per level/img)
    dice_total = jnp.float32(0.0)
    total_instances = 0
    edge_level = []
    for lvl in range(num_levels):
        se_lvl = jnp.float32(0.0)
        cnt_lvl = jnp.float32(0.0)
        lvl_has_instances = False
        for b in range(B):
            grid_order = grid_order_list[b][lvl]
            I = len(grid_order)
            if I == 0:     # static skip, mirrors `kernel_pred.size(-1) == 0`
                continue
            lvl_has_instances = True
            kp = kernel_preds[lvl][b].reshape(E, -1)            # (E, G*G)
            go = jnp.asarray(grid_order, dtype=jnp.int32)
            kernel_ie = jnp.transpose(kp[:, go], (1, 0))        # (I, E)
            target_u8 = ins_label_list[b][lvl]                  # (I, Hm, Wm) u8
            d, se, cnt = fused_instance_losses(kernel_ie, mask_preds[b],
                                               target_u8)
            dice_total = dice_total + d
            total_instances += I
            se_lvl = se_lvl + se
            cnt_lvl = cnt_lvl + cnt
        if lvl_has_instances:
            # guard cnt == 0 (torch's MSE over an empty selection would be NaN)
            edge_level.append(jnp.where(cnt_lvl > 0.0,
                                        se_lvl / jnp.maximum(cnt_lvl, 1.0),
                                        0.0))

    losses["ins"] = (dice_total / max(total_instances, 1)) * INS_LOSS_WEIGHT
    if edge_level:
        losses["edge"] = jnp.mean(jnp.stack(edge_level)) * EDGE_LOSS_WEIGHT
    else:
        losses["edge"] = jnp.float32(0.0)

    # ------------- classification (focal) loss -------------
    ins_ind_labels = [jnp.concatenate([x.reshape(-1) for x in lvl])
                      for lvl in zip(*ins_ind_label_list)]
    num_ins = jnp.sum(jnp.concatenate(ins_ind_labels).astype(jnp.float32))

    cate_labels = [jnp.concatenate([x.reshape(-1) for x in lvl])
                   for lvl in zip(*cate_label_list)]
    labels_1n = jnp.concatenate(cate_labels).astype(jnp.int32)[None, :]
    # lane-dense (C, N) layout: N (hundreds+) on lanes, classes on sublanes.
    # Column order (level, image, h, w) matches the label flattening order.
    logits_cn = jnp.concatenate(
        [jnp.transpose(cp, (1, 0, 2, 3)).reshape(NUM_CLASSES, -1)
         for cp in cate_preds], axis=1)
    focal_sum = focal_loss_sum(logits_cn, labels_1n, NUM_CLASSES,
                               FOCAL_ALPHA, FOCAL_GAMMA)
    losses["cat"] = CONF_LOSS_WEIGHT * focal_sum / (num_ins + 1.0)

    # ------------- lava loss -------------
    # The torch reference computes a lava loss and then unconditionally stores
    # losses['lav'] = tensor([0.0]); the computation is dead work, so it is
    # not emitted here at all (drops 3 kernels + a bilinear resize per image).
    losses["lav"] = jnp.zeros((1,), jnp.float32)

    return losses


# ------------------------------- main ---------------------------------------
if __name__ == "__main__":
    key = jax.random.PRNGKey(0)
    B, E, Hm, Wm = 2, 8, 16, 16
    Hd, Wd = 32, 32
    ks = jax.random.split(key, 8)

    mask_preds = jax.random.normal(ks[0], (B, E, Hm, Wm), jnp.float32)
    cate_preds = [jax.random.normal(ks[1], (B, NUM_CLASSES, NUM_GRIDS[0], NUM_GRIDS[0]), jnp.float32),
                  jax.random.normal(ks[2], (B, NUM_CLASSES, NUM_GRIDS[1], NUM_GRIDS[1]), jnp.float32)]
    kernel_preds = [jax.random.normal(ks[3], (B, E, NUM_GRIDS[0], NUM_GRIDS[0]), jnp.float32),
                    jax.random.normal(ks[4], (B, E, NUM_GRIDS[1], NUM_GRIDS[1]), jnp.float32)]
    gt_depths = jax.random.uniform(ks[5], (B, 1, Hd, Wd), jnp.float32, 0.5, 3.0)
    gt_edges = (jax.random.uniform(ks[6], (B, Hm, Wm)) > 0.8).astype(jnp.float32)

    # static synthetic ground truth (stands in for prepare_ground_truth)
    grid_orders = [
        [[3, 10], [7]],     # image 0: level0 -> 2 instances, level1 -> 1
        [[5], [2, 20]],     # image 1: level0 -> 1 instance,  level1 -> 2
    ]
    gt_struct = []
    mk = ks[7]
    for b in range(B):
        ins_labels_b, cate_labels_b, ins_ind_b = [], [], []
        for lvl, g in enumerate(NUM_GRIDS):
            orders = grid_orders[b][lvl]
            mk, sub = jax.random.split(mk)
            masks = (jax.random.uniform(sub, (len(orders), Hm, Wm)) > 0.5
                     ).astype(jnp.uint8)
            cate = jnp.full((g, g), NUM_CLASSES, jnp.int32)
            ind = jnp.zeros((g * g,), jnp.bool_)
            for j, o in enumerate(orders):
                cate = cate.at[o // g, o % g].set((b + lvl + j) % NUM_CLASSES)
                ind = ind.at[o].set(True)
            ins_labels_b.append(masks)
            cate_labels_b.append(cate)
            ins_ind_b.append(ind)
        gt_struct.append((ins_labels_b, cate_labels_b, ins_ind_b, grid_orders[b]))

    losses = plane_rec_net_loss_forward(mask_preds, cate_preds, kernel_preds,
                                        gt_struct, gt_depths, gt_edges)
    jax.block_until_ready(losses)
    print("KERNEL_OK")
</pallas_src>

<mosaic_0001>
module attributes {stable_mosaic.version = 11 : i64} {
  func.func @_fused_conv_dice_edge_kernel(%arg0: memref<2x8xf32, #tpu.memory_space<smem>>, %arg1: memref<8x16x16xf32, #tpu.memory_space<vmem>>, %arg2: memref<2x16x16xi8, #tpu.memory_space<vmem>>, %arg3: memref<1x1xf32, #tpu.memory_space<vmem>>, %arg4: memref<1x1xf32, #tpu.memory_space<vmem>>, %arg5: memref<1x1xf32, #tpu.memory_space<vmem>>, %arg6: memref<18x18xf32, #tpu.memory_space<vmem>>, %arg7: memref<18x18xf32, #tpu.memory_space<vmem>>) attributes {dimension_semantics = [], scalar_prefetch = 0 : i64, scratch_operands = 2 : i64, tpu.core_type = #tpu.core_type<tc>} {
    %c0 = arith.constant 0 : index
    %c0_0 = arith.constant 0 : index
    %c0_1 = arith.constant 0 : index
    %0 = vector.load %arg1[%c0, %c0_0, %c0_1] : memref<8x16x16xf32, #tpu.memory_space<vmem>>, vector<8x16x16xf32>
    %cst = arith.constant 0.000000e+00 : f32
    %1 = vector.broadcast %cst : f32 to vector<18x18xf32>
    %c0_2 = arith.constant 0 : index
    %c0_3 = arith.constant 0 : index
    %2 = vector.load %arg6[%c0_2, %c0_3] : memref<18x18xf32, #tpu.memory_space<vmem>>, vector<18x18xf32>
    tpu.vector_store %arg6[%c0_2, %c0_3], %1 {strides = array<i32>} : memref<18x18xf32, #tpu.memory_space<vmem>>, vector<18x18xf32>,
    %cst_4 = arith.constant 0.000000e+00 : f32
    %3 = vector.broadcast %cst_4 : f32 to vector<18x18xf32>
    %c0_5 = arith.constant 0 : index
    %c0_6 = arith.constant 0 : index
    %4 = vector.load %arg7[%c0_5, %c0_6] : memref<18x18xf32, #tpu.memory_space<vmem>>, vector<18x18xf32>
    tpu.vector_store %arg7[%c0_5, %c0_6], %3 {strides = array<i32>} : memref<18x18xf32, #tpu.memory_space<vmem>>, vector<18x18xf32>,
    %c0_7 = arith.constant 0 : index
    %c0_8 = arith.constant 0 : index
    %5 = memref.load %arg0[%c0_7, %c0_8] : memref<2x8xf32, #tpu.memory_space<smem>>
    %6 = vector.extract_strided_slice %0 {offsets = [0, 0, 0], sizes = [1, 16, 16], strides = [1, 1, 1]} : vector<8x16x16xf32> to vector<1x16x16xf32>
    %7 = vector.shape_cast %6 : vector<1x16x16xf32> to vector<16x16xf32>
    %8 = vector.broadcast %5 : f32 to vector<16x16xf32>
    %9 = arith.mulf %8, %7 : vector<16x16xf32>
    %c0_9 = arith.constant 0 : index
    %c1 = arith.constant 1 : index
    %10 = memref.load %arg0[%c0_9, %c1] : memref<2x8xf32, #tpu.memory_space<smem>>
    %11 = vector.extract_strided_slice %0 {offsets = [1, 0, 0], sizes = [1, 16, 16], strides = [1, 1, 1]} : vector<8x16x16xf32> to vector<1x16x16xf32>
    %12 = vector.shape_cast %11 : vector<1x16x16xf32> to vector<16x16xf32>
    %13 = vector.broadcast %10 : f32 to vector<16x16xf32>
    %14 = arith.mulf %13, %12 : vector<16x16xf32>
    %15 = arith.addf %9, %14 : vector<16x16xf32>
    %c0_10 = arith.constant 0 : index
    %c2 = arith.constant 2 : index
    %16 = memref.load %arg0[%c0_10, %c2] : memref<2x8xf32, #tpu.memory_space<smem>>
    %17 = vector.extract_strided_slice %0 {offsets = [2, 0, 0], sizes = [1, 16, 16], strides = [1, 1, 1]} : vector<8x16x16xf32> to vector<1x16x16xf32>
    %18 = vector.shape_cast %17 : vector<1x16x16xf32> to vector<16x16xf32>
    %19 = vector.broadcast %16 : f32 to vector<16x16xf32>
    %20 = arith.mulf %19, %18 : vector<16x16xf32>
    %21 = arith.addf %15, %20 : vector<16x16xf32>
    %c0_11 = arith.constant 0 : index
    %c3 = arith.constant 3 : index
    %22 = memref.load %arg0[%c0_11, %c3] : memref<2x8xf32, #tpu.memory_space<smem>>
    %23 = vector.extract_strided_slice %0 {offsets = [3, 0, 0], sizes = [1, 16, 16], strides = [1, 1, 1]} : vector<8x16x16xf32> to vector<1x16x16xf32>
    %24 = vector.shape_cast %23 : vector<1x16x16xf32> to vector<16x16xf32>
    %25 = vector.broadcast %22 : f32 to vector<16x16xf32>
    %26 = arith.mulf %25, %24 : vector<16x16xf32>
    %27 = arith.addf %21, %26 : vector<16x16xf32>
    %c0_12 = arith.constant 0 : index
    %c4 = arith.constant 4 : index
    %28 = memref.load %arg0[%c0_12, %c4] : memref<2x8xf32, #tpu.memory_space<smem>>
    %29 = vector.extract_strided_slice %0 {offsets = [4, 0, 0], sizes = [1, 16, 16], strides = [1, 1, 1]} : vector<8x16x16xf32> to vector<1x16x16xf32>
    %30 = vector.shape_cast %29 : vector<1x16x16xf32> to vector<16x16xf32>
    %31 = vector.broadcast %28 : f32 to vector<16x16xf32>
    %32 = arith.mulf %31, %30 : vector<16x16xf32>
    %33 = arith.addf %27, %32 : vector<16x16xf32>
    %c0_13 = arith.constant 0 : index
    %c5 = arith.constant 5 : index
    %34 = memref.load %arg0[%c0_13, %c5] : memref<2x8xf32, #tpu.memory_space<smem>>
    %35 = vector.extract_strided_slice %0 {offsets = [5, 0, 0], sizes = [1, 16, 16], strides = [1, 1, 1]} : vector<8x16x16xf32> to vector<1x16x16xf32>
    %36 = vector.shape_cast %35 : vector<1x16x16xf32> to vector<16x16xf32>
    %37 = vector.broadcast %34 : f32 to vector<16x16xf32>
    %38 = arith.mulf %37, %36 : vector<16x16xf32>
    %39 = arith.addf %33, %38 : vector<16x16xf32>
    %c0_14 = arith.constant 0 : index
    %c6 = arith.constant 6 : index
    %40 = memref.load %arg0[%c0_14, %c6] : memref<2x8xf32, #tpu.memory_space<smem>>
    %41 = vector.extract_strided_slice %0 {offsets = [6, 0, 0], sizes = [1, 16, 16], strides = [1, 1, 1]} : vector<8x16x16xf32> to vector<1x16x16xf32>
    %42 = vector.shape_cast %41 : vector<1x16x16xf32> to vector<16x16xf32>
    %43 = vector.broadcast %40 : f32 to vector<16x16xf32>
    %44 = arith.mulf %43, %42 : vector<16x16xf32>
    %45 = arith.addf %39, %44 : vector<16x16xf32>
    %c0_15 = arith.constant 0 : index
    %c7 = arith.constant 7 : index
    %46 = memref.load %arg0[%c0_15, %c7] : memref<2x8xf32, #tpu.memory_space<smem>>
    %47 = vector.extract_strided_slice %0 {offsets = [7, 0, 0], sizes = [1, 16, 16], strides = [1, 1, 1]} : vector<8x16x16xf32> to vector<1x16x16xf32>
    %48 = vector.shape_cast %47 : vector<1x16x16xf32> to vector<16x16xf32>
    %49 = vector.broadcast %46 : f32 to vector<16x16xf32>
    %50 = arith.mulf %49, %48 : vector<16x16xf32>
    %51 = arith.addf %45, %50 : vector<16x16xf32>
    %52 = arith.negf %51 : vector<16x16xf32>
    %53 = math.exp %52 : vector<16x16xf32>
    %cst_16 = arith.constant 1.000000e+00 : f32
    %54 = vector.broadcast %cst_16 : f32 to vector<16x16xf32>
    %55 = arith.addf %54, %53 : vector<16x16xf32>
    %56 = arith.divf %54, %55 : vector<16x16xf32>
    %c0_17 = arith.constant 0 : index
    %c0_18 = arith.constant 0 : index
    %c0_19 = arith.constant 0 : index
    %57 = vector.load %arg2[%c0_17, %c0_18, %c0_19] : memref<2x16x16xi8, #tpu.memory_space<vmem>>, vector<1x16x16xi8>
    %58 = vector.shape_cast %57 : vector<1x16x16xi8> to vector<16x16xi8>
    %59 = arith.uitofp %58 : vector<16x16xi8> to vector<16x16xf32>
    %60 = arith.mulf %56, %59 : vector<16x16xf32>
    %61 = vector.shape_cast %60 : vector<16x16xf32> to vector<1x16x16xf32>
    %cst_20 = arith.constant dense<0.000000e+00> : vector<1xf32>
    %62 = vector.multi_reduction <add>, %61, %cst_20 [1, 2] : vector<1x16x16xf32> to vector<1xf32>
    %63 = vector.shape_cast %62 : vector<1xf32> to vector<1x1x1xf32>
    %64 = vector.extract %63[0, 0, 0] : f32 from vector<1x1x1xf32>
    %65 = arith.mulf %56, %56 : vector<16x16xf32>
    %66 = vector.shape_cast %65 : vector<16x16xf32> to vector<1x16x16xf32>
    %cst_21 = arith.constant dense<0.000000e+00> : vector<1xf32>
    %67 = vector.multi_reduction <add>, %66, %cst_21 [1, 2] : vector<1x16x16xf32> to vector<1xf32>
    %68 = vector.shape_cast %67 : vector<1xf32> to vector<1x1x1xf32>
    %69 = vector.extract %68[0, 0, 0] : f32 from vector<1x1x1xf32>
    %cst_22 = arith.constant 1.000000e-03 : f32
    %70 = arith.addf %69, %cst_22 : f32
    %71 = arith.mulf %59, %59 : vector<16x16xf32>
    %72 = vector.shape_cast %71 : vector<16x16xf32> to vector<1x16x16xf32>
    %cst_23 = arith.constant dense<0.000000e+00> : vector<1xf32>
    %73 = vector.multi_reduction <add>, %72, %cst_23 [1, 2] : vector<1x16x16xf32> to vector<1xf32>
    %74 = vector.shape_cast %73 : vector<1xf32> to vector<1x1x1xf32>
    %75 = vector.extract %74[0, 0, 0] : f32 from vector<1x1x1xf32>
    %cst_24 = arith.constant 1.000000e-03 : f32
    %76 = arith.addf %75, %cst_24 : f32
    %cst_25 = arith.constant 2.000000e+00 : f32
    %77 = arith.mulf %cst_25, %64 : f32
    %78 = arith.addf %70, %76 : f32
    %79 = arith.divf %77, %78 : f32
    %cst_26 = arith.constant 1.000000e+00 : f32
    %80 = arith.subf %cst_26, %79 : f32
    %cst_27 = arith.constant 0.000000e+00 : f32
    %81 = arith.addf %cst_27, %80 : f32
    %c1_28 = arith.constant 1 : index
    %c1_29 = arith.constant 1 : index
    %82 = vector.load %arg6[%c1_28, %c1_29] : memref<18x18xf32, #tpu.memory_space<vmem>>, vector<16x16xf32>
    tpu.vector_store %arg6[%c1_28, %c1_29], %56 {strides = array<i32>} : memref<18x18xf32, #tpu.memory_space<vmem>>, vector<16x16xf32>,
    %c1_30 = arith.constant 1 : index
    %c1_31 = arith.constant 1 : index
    %83 = vector.load %arg7[%c1_30, %c1_31] : memref<18x18xf32, #tpu.memory_space<vmem>>, vector<16x16xf32>
    tpu.vector_store %arg7[%c1_30, %c1_31], %59 {strides = array<i32>} : memref<18x18xf32, #tpu.memory_space<vmem>>, vector<16x16xf32>,
    %c0_32 = arith.constant 0 : index
    %c0_33 = arith.constant 0 : index
    %84 = vector.load %arg6[%c0_32, %c0_33] : memref<18x18xf32, #tpu.memory_space<vmem>>, vector<18x18xf32>
    %cst_34 = arith.constant 0.000000e+00 : f32
    %85 = vector.broadcast %cst_34 : f32 to vector<16x16xf32>
    %86 = vector.extract_strided_slice %84 {offsets = [0, 0], sizes = [16, 16], strides = [1, 1]} : vector<18x18xf32> to vector<16x16xf32>
    %87 = arith.addf %85, %86 : vector<16x16xf32>
    %88 = vector.extract_strided_slice %84 {offsets = [0, 1], sizes = [16, 16], strides = [1, 1]} : vector<18x18xf32> to vector<16x16xf32>
    %89 = arith.addf %87, %88 : vector<16x16xf32>
    %90 = vector.extract_strided_slice %84 {offsets = [0, 2], sizes = [16, 16], strides = [1, 1]} : vector<18x18xf32> to vector<16x16xf32>
    %91 = arith.addf %89, %90 : vector<16x16xf32>
    %92 = vector.extract_strided_slice %84 {offsets = [1, 0], sizes = [16, 16], strides = [1, 1]} : vector<18x18xf32> to vector<16x16xf32>
    %93 = arith.addf %91, %92 : vector<16x16xf32>
    %94 = vector.extract_strided_slice %84 {offsets = [1, 1], sizes = [16, 16], strides = [1, 1]} : vector<18x18xf32> to vector<16x16xf32>
    %95 = arith.addf %93, %94 : vector<16x16xf32>
    %96 = vector.extract_strided_slice %84 {offsets = [1, 2], sizes = [16, 16], strides = [1, 1]} : vector<18x18xf32> to vector<16x16xf32>
    %97 = arith.addf %95, %96 : vector<16x16xf32>
    %98 = vector.extract_strided_slice %84 {offsets = [2, 0], sizes = [16, 16], strides = [1, 1]} : vector<18x18xf32> to vector<16x16xf32>
    %99 = arith.addf %97, %98 : vector<16x16xf32>
    %100 = vector.extract_strided_slice %84 {offsets = [2, 1], sizes = [16, 16], strides = [1, 1]} : vector<18x18xf32> to vector<16x16xf32>
    %101 = arith.addf %99, %100 : vector<16x16xf32>
    %102 = vector.extract_strided_slice %84 {offsets = [2, 2], sizes = [16, 16], strides = [1, 1]} : vector<18x18xf32> to vector<16x16xf32>
    %103 = arith.addf %101, %102 : vector<16x16xf32>
    %104 = vector.extract_strided_slice %84 {offsets = [1, 1], sizes = [16, 16], strides = [1, 1]} : vector<18x18xf32> to vector<16x16xf32>
    %cst_35 = arith.constant 9.000000e+00 : f32
    %105 = vector.broadcast %cst_35 : f32 to vector<16x16xf32>
    %106 = arith.mulf %105, %104 : vector<16x16xf32>
    %107 = arith.subf %106, %103 : vector<16x16xf32>
    %108 = math.absf %107 : vector<16x16xf32>
    %c0_36 = arith.constant 0 : index
    %c0_37 = arith.constant 0 : index
    %109 = vector.load %arg7[%c0_36, %c0_37] : memref<18x18xf32, #tpu.memory_space<vmem>>, vector<18x18xf32>
    %cst_38 = arith.constant 0.000000e+00 : f32
    %110 = vector.broadcast %cst_38 : f32 to vector<16x16xf32>
    %111 = vector.extract_strided_slice %109 {offsets = [0, 0], sizes = [16, 16], strides = [1, 1]} : vector<18x18xf32> to vector<16x16xf32>
    %112 = arith.addf %110, %111 : vector<16x16xf32>
    %113 = vector.extract_strided_slice %109 {offsets = [0, 1], sizes = [16, 16], strides = [1, 1]} : vector<18x18xf32> to vector<16x16xf32>
    %114 = arith.addf %112, %113 : vector<16x16xf32>
    %115 = vector.extract_strided_slice %109 {offsets = [0, 2], sizes = [16, 16], strides = [1, 1]} : vector<18x18xf32> to vector<16x16xf32>
    %116 = arith.addf %114, %115 : vector<16x16xf32>
    %117 = vector.extract_strided_slice %109 {offsets = [1, 0], sizes = [16, 16], strides = [1, 1]} : vector<18x18xf32> to vector<16x16xf32>
    %118 = arith.addf %116, %117 : vector<16x16xf32>
    %119 = vector.extract_strided_slice %109 {offsets = [1, 1], sizes = [16, 16], strides = [1, 1]} : vector<18x18xf32> to vector<16x16xf32>
    %120 = arith.addf %118, %119 : vector<16x16xf32>
    %121 = vector.extract_strided_slice %109 {offsets = [1, 2], sizes = [16, 16], strides = [1, 1]} : vector<18x18xf32> to vector<16x16xf32>
    %122 = arith.addf %120, %121 : vector<16x16xf32>
    %123 = vector.extract_strided_slice %109 {offsets = [2, 0], sizes = [16, 16], strides = [1, 1]} : vector<18x18xf32> to vector<16x16xf32>
    %124 = arith.addf %122, %123 : vector<16x16xf32>
    %125 = vector.extract_strided_slice %109 {offsets = [2, 1], sizes = [16, 16], strides = [1, 1]} : vector<18x18xf32> to vector<16x16xf32>
    %126 = arith.addf %124, %125 : vector<16x16xf32>
    %127 = vector.extract_strided_slice %109 {offsets = [2, 2], sizes = [16, 16], strides = [1, 1]} : vector<18x18xf32> to vector<16x16xf32>
    %128 = arith.addf %126, %127 : vector<16x16xf32>
    %129 = vector.extract_strided_slice %109 {offsets = [1, 1], sizes = [16, 16], strides = [1, 1]} : vector<18x18xf32> to vector<16x16xf32>
    %cst_39 = arith.constant 9.000000e+00 : f32
    %130 = vector.broadcast %cst_39 : f32 to vector<16x16xf32>
    %131 = arith.mulf %130, %129 : vector<16x16xf32>
    %132 = arith.subf %131, %128 : vector<16x16xf32>
    %133 = math.absf %132 : vector<16x16xf32>
    %cst_40 = arith.constant 5.000000e-01 : f32
    %134 = vector.broadcast %cst_40 : f32 to vector<16x16xf32>
    %135 = arith.cmpf oge, %108, %134 : vector<16x16xf32>
    %136 = arith.extui %135 : vector<16x16xi1> to vector<16x16xi32>
    %137 = arith.sitofp %136 : vector<16x16xi32> to vector<16x16xf32>
    %138 = arith.subf %108, %133 : vector<16x16xf32>
    %139 = arith.mulf %137, %138 : vector<16x16xf32>
    %140 = arith.mulf %139, %138 : vector<16x16xf32>
    %141 = vector.shape_cast %140 : vector<16x16xf32> to vector<1x16x16xf32>
    %cst_41 = arith.constant dense<0.000000e+00> : vector<1xf32>
    %142 = vector.multi_reduction <add>, %141, %cst_41 [1, 2] : vector<1x16x16xf32> to vector<1xf32>
    %143 = vector.shape_cast %142 : vector<1xf32> to vector<1x1x1xf32>
    %144 = vector.extract %143[0, 0, 0] : f32 from vector<1x1x1xf32>
    %cst_42 = arith.constant 0.000000e+00 : f32
    %145 = arith.addf %cst_42, %144 : f32
    %146 = vector.shape_cast %137 : vector<16x16xf32> to vector<1x16x16xf32>
    %cst_43 = arith.constant dense<0.000000e+00> : vector<1xf32>
    %147 = vector.multi_reduction <add>, %146, %cst_43 [1, 2] : vector<1x16x16xf32> to vector<1xf32>
    %148 = vector.shape_cast %147 : vector<1xf32> to vector<1x1x1xf32>
    %149 = vector.extract %148[0, 0, 0] : f32 from vector<1x1x1xf32>
    %cst_44 = arith.constant 0.000000e+00 : f32
    %150 = arith.addf %cst_44, %149 : f32
    %c1_45 = arith.constant 1 : index
    %c0_46 = arith.constant 0 : index
    %151 = memref.load %arg0[%c1_45, %c0_46] : memref<2x8xf32, #tpu.memory_space<smem>>
    %152 = vector.extract_strided_slice %0 {offsets = [0, 0, 0], sizes = [1, 16, 16], strides = [1, 1, 1]} : vector<8x16x16xf32> to vector<1x16x16xf32>
    %153 = vector.shape_cast %152 : vector<1x16x16xf32> to vector<16x16xf32>
    %154 = vector.broadcast %151 : f32 to vector<16x16xf32>
    %155 = arith.mulf %154, %153 : vector<16x16xf32>
    %c1_47 = arith.constant 1 : index
    %c1_48 = arith.constant 1 : index
    %156 = memref.load %arg0[%c1_47, %c1_48] : memref<2x8xf32, #tpu.memory_space<smem>>
    %157 = vector.extract_strided_slice %0 {offsets = [1, 0, 0], sizes = [1, 16, 16], strides = [1, 1, 1]} : vector<8x16x16xf32> to vector<1x16x16xf32>
    %158 = vector.shape_cast %157 : vector<1x16x16xf32> to vector<16x16xf32>
    %159 = vector.broadcast %156 : f32 to vector<16x16xf32>
    %160 = arith.mulf %159, %158 : vector<16x16xf32>
    %161 = arith.addf %155, %160 : vector<16x16xf32>
    %c1_49 = arith.constant 1 : index
    %c2_50 = arith.constant 2 : index
    %162 = memref.load %arg0[%c1_49, %c2_50] : memref<2x8xf32, #tpu.memory_space<smem>>
    %163 = vector.extract_strided_slice %0 {offsets = [2, 0, 0], sizes = [1, 16, 16], strides = [1, 1, 1]} : vector<8x16x16xf32> to vector<1x16x16xf32>
    %164 = vector.shape_cast %163 : vector<1x16x16xf32> to vector<16x16xf32>
    %165 = vector.broadcast %162 : f32 to vector<16x16xf32>
    %166 = arith.mulf %165, %164 : vector<16x16xf32>
    %167 = arith.addf %161, %166 : vector<16x16xf32>
    %c1_51 = arith.constant 1 : index
    %c3_52 = arith.constant 3 : index
    %168 = memref.load %arg0[%c1_51, %c3_52] : memref<2x8xf32, #tpu.memory_space<smem>>
    %169 = vector.extract_strided_slice %0 {offsets = [3, 0, 0], sizes = [1, 16, 16], strides = [1, 1, 1]} : vector<8x16x16xf32> to vector<1x16x16xf32>
    %170 = vector.shape_cast %169 : vector<1x16x16xf32> to vector<16x16xf32>
    %171 = vector.broadcast %168 : f32 to vector<16x16xf32>
    %172 = arith.mulf %171, %170 : vector<16x16xf32>
    %173 = arith.addf %167, %172 : vector<16x16xf32>
    %c1_53 = arith.constant 1 : index
    %c4_54 = arith.constant 4 : index
    %174 = memref.load %arg0[%c1_53, %c4_54] : memref<2x8xf32, #tpu.memory_space<smem>>
    %175 = vector.extract_strided_slice %0 {offsets = [4, 0, 0], sizes = [1, 16, 16], strides = [1, 1, 1]} : vector<8x16x16xf32> to vector<1x16x16xf32>
    %176 = vector.shape_cast %175 : vector<1x16x16xf32> to vector<16x16xf32>
    %177 = vector.broadcast %174 : f32 to vector<16x16xf32>
    %178 = arith.mulf %177, %176 : vector<16x16xf32>
    %179 = arith.addf %173, %178 : vector<16x16xf32>
    %c1_55 = arith.constant 1 : index
    %c5_56 = arith.constant 5 : index
    %180 = memref.load %arg0[%c1_55, %c5_56] : memref<2x8xf32, #tpu.memory_space<smem>>
    %181 = vector.extract_strided_slice %0 {offsets = [5, 0, 0], sizes = [1, 16, 16], strides = [1, 1, 1]} : vector<8x16x16xf32> to vector<1x16x16xf32>
    %182 = vector.shape_cast %181 : vector<1x16x16xf32> to vector<16x16xf32>
    %183 = vector.broadcast %180 : f32 to vector<16x16xf32>
    %184 = arith.mulf %183, %182 : vector<16x16xf32>
    %185 = arith.addf %179, %184 : vector<16x16xf32>
    %c1_57 = arith.constant 1 : index
    %c6_58 = arith.constant 6 : index
    %186 = memref.load %arg0[%c1_57, %c6_58] : memref<2x8xf32, #tpu.memory_space<smem>>
    %187 = vector.extract_strided_slice %0 {offsets = [6, 0, 0], sizes = [1, 16, 16], strides = [1, 1, 1]} : vector<8x16x16xf32> to vector<1x16x16xf32>
    %188 = vector.shape_cast %187 : vector<1x16x16xf32> to vector<16x16xf32>
    %189 = vector.broadcast %186 : f32 to vector<16x16xf32>
    %190 = arith.mulf %189, %188 : vector<16x16xf32>
    %191 = arith.addf %185, %190 : vector<16x16xf32>
    %c1_59 = arith.constant 1 : index
    %c7_60 = arith.constant 7 : index
    %192 = memref.load %arg0[%c1_59, %c7_60] : memref<2x8xf32, #tpu.memory_space<smem>>
    %193 = vector.extract_strided_slice %0 {offsets = [7, 0, 0], sizes = [1, 16, 16], strides = [1, 1, 1]} : vector<8x16x16xf32> to vector<1x16x16xf32>
    %194 = vector.shape_cast %193 : vector<1x16x16xf32> to vector<16x16xf32>
    %195 = vector.broadcast %192 : f32 to vector<16x16xf32>
    %196 = arith.mulf %195, %194 : vector<16x16xf32>
    %197 = arith.addf %191, %196 : vector<16x16xf32>
    %198 = arith.negf %197 : vector<16x16xf32>
    %199 = math.exp %198 : vector<16x16xf32>
    %cst_61 = arith.constant 1.000000e+00 : f32
    %200 = vector.broadcast %cst_61 : f32 to vector<16x16xf32>
    %201 = arith.addf %200, %199 : vector<16x16xf32>
    %202 = arith.divf %200, %201 : vector<16x16xf32>
    %c1_62 = arith.constant 1 : index
    %c0_63 = arith.constant 0 : index
    %c0_64 = arith.constant 0 : index
    %203 = vector.load %arg2[%c1_62, %c0_63, %c0_64] : memref<2x16x16xi8, #tpu.memory_space<vmem>>, vector<1x16x16xi8>
    %204 = vector.shape_cast %203 : vector<1x16x16xi8> to vector<16x16xi8>
    %205 = arith.uitofp %204 : vector<16x16xi8> to vector<16x16xf32>
    %206 = arith.mulf %202, %205 : vector<16x16xf32>
    %207 = vector.shape_cast %206 : vector<16x16xf32> to vector<1x16x16xf32>
    %cst_65 = arith.constant dense<0.000000e+00> : vector<1xf32>
    %208 = vector.multi_reduction <add>, %207, %cst_65 [1, 2] : vector<1x16x16xf32> to vector<1xf32>
    %209 = vector.shape_cast %208 : vector<1xf32> to vector<1x1x1xf32>
    %210 = vector.extract %209[0, 0, 0] : f32 from vector<1x1x1xf32>
    %211 = arith.mulf %202, %202 : vector<16x16xf32>
    %212 = vector.shape_cast %211 : vector<16x16xf32> to vector<1x16x16xf32>
    %cst_66 = arith.constant dense<0.000000e+00> : vector<1xf32>
    %213 = vector.multi_reduction <add>, %212, %cst_66 [1, 2] : vector<1x16x16xf32> to vector<1xf32>
    %214 = vector.shape_cast %213 : vector<1xf32> to vector<1x1x1xf32>
    %215 = vector.extract %214[0, 0, 0] : f32 from vector<1x1x1xf32>
    %cst_67 = arith.constant 1.000000e-03 : f32
    %216 = arith.addf %215, %cst_67 : f32
    %217 = arith.mulf %205, %205 : vector<16x16xf32>
    %218 = vector.shape_cast %217 : vector<16x16xf32> to vector<1x16x16xf32>
    %cst_68 = arith.constant dense<0.000000e+00> : vector<1xf32>
    %219 = vector.multi_reduction <add>, %218, %cst_68 [1, 2] : vector<1x16x16xf32> to vector<1xf32>
    %220 = vector.shape_cast %219 : vector<1xf32> to vector<1x1x1xf32>
    %221 = vector.extract %220[0, 0, 0] : f32 from vector<1x1x1xf32>
    %cst_69 = arith.constant 1.000000e-03 : f32
    %222 = arith.addf %221, %cst_69 : f32
    %cst_70 = arith.constant 2.000000e+00 : f32
    %223 = arith.mulf %cst_70, %210 : f32
    %224 = arith.addf %216, %222 : f32
    %225 = arith.divf %223, %224 : f32
    %cst_71 = arith.constant 1.000000e+00 : f32
    %226 = arith.subf %cst_71, %225 : f32
    %227 = arith.addf %81, %226 : f32
    %c1_72 = arith.constant 1 : index
    %c1_73 = arith.constant 1 : index
    %228 = vector.load %arg6[%c1_72, %c1_73] : memref<18x18xf32, #tpu.memory_space<vmem>>, vector<16x16xf32>
    tpu.vector_store %arg6[%c1_72, %c1_73], %202 {strides = array<i32>} : memref<18x18xf32, #tpu.memory_space<vmem>>, vector<16x16xf32>,
    %c1_74 = arith.constant 1 : index
    %c1_75 = arith.constant 1 : index
    %229 = vector.load %arg7[%c1_74, %c1_75] : memref<18x18xf32, #tpu.memory_space<vmem>>, vector<16x16xf32>
    tpu.vector_store %arg7[%c1_74, %c1_75], %205 {strides = array<i32>} : memref<18x18xf32, #tpu.memory_space<vmem>>, vector<16x16xf32>,
    %c0_76 = arith.constant 0 : index
    %c0_77 = arith.constant 0 : index
    %230 = vector.load %arg6[%c0_76, %c0_77] : memref<18x18xf32, #tpu.memory_space<vmem>>, vector<18x18xf32>
    %cst_78 = arith.constant 0.000000e+00 : f32
    %231 = vector.broadcast %cst_78 : f32 to vector<16x16xf32>
    %232 = vector.extract_strided_slice %230 {offsets = [0, 0], sizes = [16, 16], strides = [1, 1]} : vector<18x18xf32> to vector<16x16xf32>
    %233 = arith.addf %231, %232 : vector<16x16xf32>
    %234 = vector.extract_strided_slice %230 {offsets = [0, 1], sizes = [16, 16], strides = [1, 1]} : vector<18x18xf32> to vector<16x16xf32>
    %235 = arith.addf %233, %234 : vector<16x16xf32>
    %236 = vector.extract_strided_slice %230 {offsets = [0, 2], sizes = [16, 16], strides = [1, 1]} : vector<18x18xf32> to vector<16x16xf32>
    %237 = arith.addf %235, %236 : vector<16x16xf32>
    %238 = vector.extract_strided_slice %230 {offsets = [1, 0], sizes = [16, 16], strides = [1, 1]} : vector<18x18xf32> to vector<16x16xf32>
    %239 = arith.addf %237, %238 : vector<16x16xf32>
    %240 = vector.extract_strided_slice %230 {offsets = [1, 1], sizes = [16, 16], strides = [1, 1]} : vector<18x18xf32> to vector<16x16xf32>
    %241 = arith.addf %239, %240 : vector<16x16xf32>
    %242 = vector.extract_strided_slice %230 {offsets = [1, 2], sizes = [16, 16], strides = [1, 1]} : vector<18x18xf32> to vector<16x16xf32>
    %243 = arith.addf %241, %242 : vector<16x16xf32>
    %244 = vector.extract_strided_slice %230 {offsets = [2, 0], sizes = [16, 16], strides = [1, 1]} : vector<18x18xf32> to vector<16x16xf32>
    %245 = arith.addf %243, %244 : vector<16x16xf32>
    %246 = vector.extract_strided_slice %230 {offsets = [2, 1], sizes = [16, 16], strides = [1, 1]} : vector<18x18xf32> to vector<16x16xf32>
    %247 = arith.addf %245, %246 : vector<16x16xf32>
    %248 = vector.extract_strided_slice %230 {offsets = [2, 2], sizes = [16, 16], strides = [1, 1]} : vector<18x18xf32> to vector<16x16xf32>
    %249 = arith.addf %247, %248 : vector<16x16xf32>
    %250 = vector.extract_strided_slice %230 {offsets = [1, 1], sizes = [16, 16], strides = [1, 1]} : vector<18x18xf32> to vector<16x16xf32>
    %cst_79 = arith.constant 9.000000e+00 : f32
    %251 = vector.broadcast %cst_79 : f32 to vector<16x16xf32>
    %252 = arith.mulf %251, %250 : vector<16x16xf32>
    %253 = arith.subf %252, %249 : vector<16x16xf32>
    %254 = math.absf %253 : vector<16x16xf32>
    %c0_80 = arith.constant 0 : index
    %c0_81 = arith.constant 0 : index
    %255 = vector.load %arg7[%c0_80, %c0_81] : memref<18x18xf32, #tpu.memory_space<vmem>>, vector<18x18xf32>
    %cst_82 = arith.constant 0.000000e+00 : f32
    %256 = vector.broadcast %cst_82 : f32 to vector<16x16xf32>
    %257 = vector.extract_strided_slice %255 {offsets = [0, 0], sizes = [16, 16], strides = [1, 1]} : vector<18x18xf32> to vector<16x16xf32>
    %258 = arith.addf %256, %257 : vector<16x16xf32>
    %259 = vector.extract_strided_slice %255 {offsets = [0, 1], sizes = [16, 16], strides = [1, 1]} : vector<18x18xf32> to vector<16x16xf32>
    %260 = arith.addf %258, %259 : vector<16x16xf32>
    %261 = vector.extract_strided_slice %255 {offsets = [0, 2], sizes = [16, 16], strides = [1, 1]} : vector<18x18xf32> to vector<16x16xf32>
    %262 = arith.addf %260, %261 : vector<16x16xf32>
    %263 = vector.extract_strided_slice %255 {offsets = [1, 0], sizes = [16, 16], strides = [1, 1]} : vector<18x18xf32> to vector<16x16xf32>
    %264 = arith.addf %262, %263 : vector<16x16xf32>
    %265 = vector.extract_strided_slice %255 {offsets = [1, 1], sizes = [16, 16], strides = [1, 1]} : vector<18x18xf32> to vector<16x16xf32>
    %266 = arith.addf %264, %265 : vector<16x16xf32>
    %267 = vector.extract_strided_slice %255 {offsets = [1, 2], sizes = [16, 16], strides = [1, 1]} : vector<18x18xf32> to vector<16x16xf32>
    %268 = arith.addf %266, %267 : vector<16x16xf32>
    %269 = vector.extract_strided_slice %255 {offsets = [2, 0], sizes = [16, 16], strides = [1, 1]} : vector<18x18xf32> to vector<16x16xf32>
    %270 = arith.addf %268, %269 : vector<16x16xf32>
    %271 = vector.extract_strided_slice %255 {offsets = [2, 1], sizes = [16, 16], strides = [1, 1]} : vector<18x18xf32> to vector<16x16xf32>
    %272 = arith.addf %270, %271 : vector<16x16xf32>
    %273 = vector.extract_strided_slice %255 {offsets = [2, 2], sizes = [16, 16], strides = [1, 1]} : vector<18x18xf32> to vector<16x16xf32>
    %274 = arith.addf %272, %273 : vector<16x16xf32>
    %275 = vector.extract_strided_slice %255 {offsets = [1, 1], sizes = [16, 16], strides = [1, 1]} : vector<18x18xf32> to vector<16x16xf32>
    %cst_83 = arith.constant 9.000000e+00 : f32
    %276 = vector.broadcast %cst_83 : f32 to vector<16x16xf32>
    %277 = arith.mulf %276, %275 : vector<16x16xf32>
    %278 = arith.subf %277, %274 : vector<16x16xf32>
    %279 = math.absf %278 : vector<16x16xf32>
    %cst_84 = arith.constant 5.000000e-01 : f32
    %280 = vector.broadcast %cst_84 : f32 to vector<16x16xf32>
    %281 = arith.cmpf oge, %254, %280 : vector<16x16xf32>
    %282 = arith.extui %281 : vector<16x16xi1> to vector<16x16xi32>
    %283 = arith.sitofp %282 : vector<16x16xi32> to vector<16x16xf32>
    %284 = arith.subf %254, %279 : vector<16x16xf32>
    %285 = arith.mulf %283, %284 : vector<16x16xf32>
    %286 = arith.mulf %285, %284 : vector<16x16xf32>
    %287 = vector.shape_cast %286 : vector<16x16xf32> to vector<1x16x16xf32>
    %cst_85 = arith.constant dense<0.000000e+00> : vector<1xf32>
    %288 = vector.multi_reduction <add>, %287, %cst_85 [1, 2] : vector<1x16x16xf32> to vector<1xf32>
    %289 = vector.shape_cast %288 : vector<1xf32> to vector<1x1x1xf32>
    %290 = vector.extract %289[0, 0, 0] : f32 from vector<1x1x1xf32>
    %291 = arith.addf %145, %290 : f32
    %292 = vector.shape_cast %283 : vector<16x16xf32> to vector<1x16x16xf32>
    %cst_86 = arith.constant dense<0.000000e+00> : vector<1xf32>
    %293 = vector.multi_reduction <add>, %292, %cst_86 [1, 2] : vector<1x16x16xf32> to vector<1xf32>
    %294 = vector.shape_cast %293 : vector<1xf32> to vector<1x1x1xf32>
    %295 = vector.extract %294[0, 0, 0] : f32 from vector<1x1x1xf32>
    %296 = arith.addf %150, %295 : f32
    %297 = vector.broadcast %227 : f32 to vector<1x1xf32>
    %c0_87 = arith.constant 0 : index
    %c0_88 = arith.constant 0 : index
    %298 = vector.load %arg3[%c0_87, %c0_88] : memref<1x1xf32, #tpu.memory_space<vmem>>, vector<1x1xf32>
    tpu.vector_store %arg3[%c0_87, %c0_88], %297 {strides = array<i32>} : memref<1x1xf32, #tpu.memory_space<vmem>>, vector<1x1xf32>,
    %299 = vector.broadcast %291 : f32 to vector<1x1xf32>
    %c0_89 = arith.constant 0 : index
    %c0_90 = arith.constant 0 : index
    %300 = vector.load %arg4[%c0_89, %c0_90] : memref<1x1xf32, #tpu.memory_space<vmem>>, vector<1x1xf32>
    tpu.vector_store %arg4[%c0_89, %c0_90], %299 {strides = array<i32>} : memref<1x1xf32, #tpu.memory_space<vmem>>, vector<1x1xf32>,
    %301 = vector.broadcast %296 : f32 to vector<1x1xf32>
    %c0_91 = arith.constant 0 : index
    %c0_92 = arith.constant 0 : index
    %302 = vector.load %arg5[%c0_91, %c0_92] : memref<1x1xf32, #tpu.memory_space<vmem>>, vector<1x1xf32>
    tpu.vector_store %arg5[%c0_91, %c0_92], %301 {strides = array<i32>} : memref<1x1xf32, #tpu.memory_space<vmem>>, vector<1x1xf32>,
    return
  }
}

</mosaic_0001>

<llo_original>
// kernel: tpu_custom_call.1
$region0: #{tpu_custom_call.1}
  #allocation0 [shape = 'u32[]', space=smem, size = 0x4, offset = 0x4, fixed_abs, tag = 'smem constant byte address 0x4 - core index']
  #allocation1 [shape = 'u32[72,128]{1,0:T(1,128)}', space=vmem, size = 0x9000, scoped, tag = 'internal scratch']
  #allocation2 [shape = 'f32[18,18]{1,0:T(8,128)}', space=vmem, size = 0x3000, scoped, tag = 'scratch operand']
  #allocation3 [shape = 'f32[18,18]{1,0:T(8,128)}', space=vmem, size = 0x3000, scoped, tag = 'scratch operand']
  %s0 = inlined_call_operand.hbm [shape: f32[2,8], index: 0, kind: input, shape index: {}]
  %s1 = inlined_call_operand.hbm [shape: f32[8,16,16], index: 1, kind: input, shape index: {}]
  %s2 = inlined_call_operand.hbm [shape: u8[2,16,16], index: 2, kind: input, shape index: {}]
  %s3 = inlined_call_operand.hbm [shape: f32[1,1], index: 3, kind: output, shape index: {0}]
  %s4 = inlined_call_operand.hbm [shape: f32[1,1], index: 4, kind: output, shape index: {1}]
  %s5 = inlined_call_operand.hbm [shape: f32[1,1], index: 5, kind: output, shape index: {2}]
  %6 = xla_tuple %s3, %s4, %s5
  %s7 = sld [smem:[#allocation0]]
  $region50: #{tpu_custom_call.1} parent=0
    _
  %s9 = ssub.s32 1, %s7
  %s10 = scalar_select 0, %s9, %s7
  $region1: #{tpu_custom_call.1} parent=0
    #allocation4 [shape = 'u8[1024]{0}', space=smem, size = 0x400, scoped, tag = 'input window, operand 0, single buffered']
    #allocation5 [shape = 's32[1]{0}', space=sflag, size = 0x4, scoped, tag = 'scoped memory for tpu_custom_call.1']
    #allocation6 [shape = 's32[1]{0}', space=sflag, size = 0x4, scoped, tag = 'scoped memory for tpu_custom_call.1']
    #allocation7 [shape = 's32[1]{0}', space=sflag, size = 0x4, scoped, tag = 'scoped memory for tpu_custom_call.1']
    #allocation8 [shape = 'u8[65536]{0}', space=vmem, size = 0x10000, scoped, tag = 'input window, operand 1, single buffered']
    #allocation9 [shape = 'u8[4096]{0}', space=vmem, size = 0x1000, scoped, tag = 'input window, operand 2, single buffered']
    #allocation10 [shape = 's32[1]{0}', space=sflag, size = 0x4, scoped, tag = 'scoped memory for tpu_custom_call.1']
    #allocation11 [shape = 'u8[512]{0}', space=vmem, size = 0x400, scoped, tag = 'output window, operand 0, single buffered']
    #allocation12 [shape = 'u8[512]{0}', space=vmem, size = 0x400, scoped, tag = 'output window, operand 1, single buffered']
    #allocation13 [shape = 's32[1]{0}', space=sflag, size = 0x4, scoped, tag = 'scoped memory for tpu_custom_call.1']
    #allocation14 [shape = 'u8[512]{0}', space=vmem, size = 0x400, scoped, tag = 'output window, operand 2, single buffered']
    %11 = vsyncpa [#allocation7], 0
    %12 = vsyncpa [#allocation5], 0
    %13 = vsyncpa [#allocation10], 0
    %14 = vsyncpa [#allocation6], 0
    %15 = vsyncpa [#allocation13], 0
    // Predicated region
    $region2: #{tpu_custom_call.1} parent=1 // pred_check
      _
    $region3: #{tpu_custom_call.1} parent=1 // pred_check_branch
      %17 = sbr.rel (0) target = $region5
    $region4: #{tpu_custom_call.1} parent=1 // pred_region
      %19 = vsyncadd [#allocation7], 0
      %s21 = sshll.u32 %s0, 4
      %s22 = int_to_ptr.hbm [resolvable:$true] %s21
      %24 = dma.hbm_to_smem %s22, 32, [#allocation4], [#allocation7]
    $region5: #{tpu_custom_call.1} parent=1 // pred_fallthru
      _
    // Predicated region
    $region6: #{tpu_custom_call.1} parent=1 // pred_check
      _
    $region7: #{tpu_custom_call.1} parent=1 // pred_check_branch
      %26 = sbr.rel (0) target = $region9
    $region8: #{tpu_custom_call.1} parent=1 // pred_region
      %28 = vsyncadd [#allocation5], 0
      %s29 = sshll.u32 %s1, 4
      %s30 = int_to_ptr.hbm [resolvable:$true] %s29
      %s31 = sshll.u32 [#allocation8], 4
      %s32 = int_to_ptr.vmem [resolvable:$true] %s31
      %37 = dma.hbm_to_vmem [thread:$0]  %s30, 2048, %s32, [#allocation5], 128, 128, 8
    $region9: #{tpu_custom_call.1} parent=1 // pred_fallthru
      _
    // Predicated region
    $region10: #{tpu_custom_call.1} parent=1 // pred_check
      _
    $region11: #{tpu_custom_call.1} parent=1 // pred_check_branch
      %39 = sbr.rel (0) target = $region13
    $region12: #{tpu_custom_call.1} parent=1 // pred_region
      %41 = vsyncadd [#allocation10], 0
      %s42 = sshll.u32 %s2, 4
      %s43 = int_to_ptr.hbm [resolvable:$true] %s42
      %s44 = sshll.u32 [#allocation9], 4
      %s45 = int_to_ptr.vmem [resolvable:$true] %s44
      %50 = dma.hbm_to_vmem [thread:$0]  %s43, 128, %s45, [#allocation10], 32, 32, 2
    $region13: #{tpu_custom_call.1} parent=1 // pred_fallthru
      _
    // Predicated region
    $region14: #{tpu_custom_call.1} parent=1 // pred_check
      _
    $region15: #{tpu_custom_call.1} parent=1 // pred_check_branch
      %52 = sbr.rel (0) target = $region17
    $region16: #{tpu_custom_call.1} parent=1 // pred_region
      %54 = dma.done [#allocation7], 32
    $region17: #{tpu_custom_call.1} parent=1 // pred_fallthru
      _
    // Predicated region
    $region18: #{tpu_custom_call.1} parent=1 // pred_check
      _
    $region19: #{tpu_custom_call.1} parent=1 // pred_check_branch
      %56 = sbr.rel (0) target = $region21
    $region20: #{tpu_custom_call.1} parent=1 // pred_region
      %58 = dma.done [#allocation5], 2048
    $region21: #{tpu_custom_call.1} parent=1 // pred_fallthru
      _
    // Predicated region
    $region22: #{tpu_custom_call.1} parent=1 // pred_check
      _
    $region23: #{tpu_custom_call.1} parent=1 // pred_check_branch
      %60 = sbr.rel (0) target = $region25
    $region24: #{tpu_custom_call.1} parent=1 // pred_region
      %62 = dma.done [#allocation10], 128
    $region25: #{tpu_custom_call.1} parent=1 // pred_fallthru
      _
    %63 = sfence
    %v64 = vld [vmem:[#allocation8] sm:$0xff]
    %v65 = vld [vmem:[#allocation8 + $0x8] sm:$0xff]
    %v66 = vld [vmem:[#allocation8 + $0x10] sm:$0xff]
    %v67 = vld [vmem:[#allocation8 + $0x18] sm:$0xff]
    %v68 = vld [vmem:[#allocation8 + $0x20] sm:$0xff]
    %v69 = vld [vmem:[#allocation8 + $0x28] sm:$0xff]
    %v70 = vld [vmem:[#allocation8 + $0x30] sm:$0xff]
    %v71 = vld [vmem:[#allocation8 + $0x38] sm:$0xff]
    %v72 = vld [vmem:[#allocation8 + $0x40] sm:$0xff]
    %v73 = vld [vmem:[#allocation8 + $0x48] sm:$0xff]
    %v74 = vld [vmem:[#allocation8 + $0x50] sm:$0xff]
    %v75 = vld [vmem:[#allocation8 + $0x58] sm:$0xff]
    %v76 = vld [vmem:[#allocation8 + $0x60] sm:$0xff]
    %v77 = vld [vmem:[#allocation8 + $0x68] sm:$0xff]
    %v78 = vld [vmem:[#allocation8 + $0x70] sm:$0xff]
    %v79 = vld [vmem:[#allocation8 + $0x78] sm:$0xff]
    %vm80 = vcmask 146432
    %81 = vst.msk [vmem:[#allocation2] sm:$0xff] %vm80, 0.0
    %82 = vst.msk [vmem:[#allocation2 + $0x8] sm:$0xff] %vm80, 0.0
    %vm83 = vcmask 140288
    %84 = vst.msk [vmem:[#allocation2 + $0x10] sm:$0x3] %vm83, 0.0
    %85 = vst.msk [vmem:[#allocation3] sm:$0xff] %vm80, 0.0
    %86 = vst.msk [vmem:[#allocation3 + $0x8] sm:$0xff] %vm80, 0.0
    %87 = vst.msk [vmem:[#allocation3 + $0x10] sm:$0x3] %vm83, 0.0
    %s88 = sld [smem:[#allocation4]]
    %v89 = vstv %s88
    %v90 = vmul.f32 %v89, %v64
    %v91 = vmul.f32 %v89, %v65
    %s92 = sld [smem:[#allocation4 + $0x1]]
    %v93 = vstv %s92
    %v94 = vmul.f32 %v93, %v66
    %v95 = vmul.f32 %v93, %v67
    %v96 = vadd.f32 %v90, %v94
    %v97 = vadd.f32 %v91, %v95
    %s98 = sld [smem:[#allocation4 + $0x2]]
    %v99 = vstv %s98
    %v100 = vmul.f32 %v99, %v68
    %v101 = vmul.f32 %v99, %v69
    %v102 = vadd.f32 %v96, %v100
    %v103 = vadd.f32 %v97, %v101
    %s104 = sld [smem:[#allocation4 + $0x3]]
    %v105 = vstv %s104
    %v106 = vmul.f32 %v105, %v70
    %v107 = vmul.f32 %v105, %v71
    %v108 = vadd.f32 %v102, %v106
    %v109 = vadd.f32 %v103, %v107
    %s110 = sld [smem:[#allocation4 + $0x4]]
    %v111 = vstv %s110
    %v112 = vmul.f32 %v111, %v72
    %v113 = vmul.f32 %v111, %v73
    %v114 = vadd.f32 %v108, %v112
    %v115 = vadd.f32 %v109, %v113
    %s116 = sld [smem:[#allocation4 + $0x5]]
    %v117 = vstv %s116
    %v118 = vmul.f32 %v117, %v74
    %v119 = vmul.f32 %v117, %v75
    %v120 = vadd.f32 %v114, %v118
    %v121 = vadd.f32 %v115, %v119
    %s122 = sld [smem:[#allocation4 + $0x6]]
    %v123 = vstv %s122
    %v124 = vmul.f32 %v123, %v76
    %v125 = vmul.f32 %v123, %v77
    %v126 = vadd.f32 %v120, %v124
    %v127 = vadd.f32 %v121, %v125
    %s128 = sld [smem:[#allocation4 + $0x7]]
    %v129 = vstv %s128
    %v130 = vmul.f32 %v129, %v78
    %v131 = vmul.f32 %v129, %v79
    %v132 = vadd.f32 %v126, %v130
    %v133 = vadd.f32 %v127, %v131
    %v134 = vxor.u32 %v132, 2147483648
    %v135 = vxor.u32 %v133, 2147483648
    %v136 = vmul.f32 %v134, 1.442695
    %v137 = vpow.pop %v136
    %v138 = vmul.f32 %v135, 1.442695
    %v139 = vpow.pop %v138
    %v140 = vadd.f32 %v137, 1.0
    %v141 = vadd.f32 %v139, 1.0
    %v142 = vrcp.pop %v140
    %v143 = vmul.f32 %v140, %v142
    %v144 = vsub.f32 1.0, %v143
    %v145 = vmul.f32 %v142, %v144
    %v146 = vadd.f32 %v142, %v145
    %vm147 = vweird.f32 %v140
    %vm148 = vweird.f32 %v142
    %vm149 = vmor %vm147, %vm148
    %v150 = vsel %vm149, %v142, %v146
    %v151 = vand.u32 2147483647, %v140
    %vm152 = vcmp.eq.f32.partialorder %v151, 8.507059e+37
    %v153 = vand.u32 %v140, 2147483648
    %v154 = vor.u32 1.1754944e-38, %v153
    %v155 = vsel %vm152, %v154, %v150
    %v156 = vmul.f32 1.0, %v155
    %v157 = vrcp.pop %v141
    %v158 = vmul.f32 %v141, %v157
    %v159 = vsub.f32 1.0, %v158
    %v160 = vmul.f32 %v157, %v159
    %v161 = vadd.f32 %v157, %v160
    %vm162 = vweird.f32 %v141
    %vm163 = vweird.f32 %v157
    %vm164 = vmor %vm162, %vm163
    %v165 = vsel %vm164, %v157, %v161
    %v166 = vand.u32 2147483647, %v141
    %vm167 = vcmp.eq.f32.partialorder %v166, 8.507059e+37
    %v168 = vand.u32 %v141, 2147483648
    %v169 = vor.u32 1.1754944e-38, %v168
    %v170 = vsel %vm167, %v169, %v165
    %v171 = vmul.f32 1.0, %v170
    %v172 = vld [vmem:[#allocation9] sm:$0x3]
    %v173 = vld [vmem:[#allocation9 + $0x2] sm:$0x3]
    %v174 = vunpack.c.0.s8 %v172
    %v175 = vunpack.c.0.s8 %v173
    %v176 = vand.u32 %v174, 255
    %v177 = vand.u32 %v175, 255
    %v178 = vcvt.s32.f32 %v176
    %v179 = vcvt.s32.f32 %v177
    %v180 = vmul.f32 %v156, %v178
    %v181 = vmul.f32 %v171, %v179
    %vm182 = vcmask 130048
    %v183 = vsel %vm182, %v180, 0.0
    %v184 = vsel %vm182, %v181, 0.0
    %v185 = vadd.f32 %v183, %v184
    %186 = vadd.xlane.f32.xlu0 %v185
    %v187 = vpop.xlane.xlu0 %186
    %v188 = vrot.slane %v187, 4
    %v189 = vadd.f32 %v187, %v188
    %v190 = vrot.slane %v189, 2
    %v191 = vadd.f32 %v189, %v190
    %v192 = vrot.slane %v191, 1
    %v193 = vadd.f32 %v191, %v192
    %s194 = vtos %v193
    %v195 = vmul.f32 %v156, %v156
    %v196 = vmul.f32 %v171, %v171
    %v197 = vsel %vm182, %v195, 0.0
    %v198 = vsel %vm182, %v196, 0.0
    %v199 = vadd.f32 %v197, %v198
    %200 = vadd.xlane.f32.xlu0 %v199
    %v201 = vpop.xlane.xlu0 %200
    %v202 = vrot.slane %v201, 4
    %v203 = vadd.f32 %v201, %v202
    %v204 = vrot.slane %v203, 2
    %v205 = vadd.f32 %v203, %v204
    %v206 = vrot.slane %v205, 1
    %v207 = vadd.f32 %v205, %v206
    %s208 = vtos %v207
    %s209 = sadd.f32 %s208, 0.001
    %v210 = vmul.f32 %v178, %v178
    %v211 = vmul.f32 %v179, %v179
    %v212 = vsel %vm182, %v210, 0.0
    %v213 = vsel %vm182, %v211, 0.0
    %v214 = vadd.f32 %v212, %v213
    %215 = vadd.xlane.f32.xlu0 %v214
    %v216 = vpop.xlane.xlu0 %215
    %v217 = vrot.slane %v216, 4
    %v218 = vadd.f32 %v216, %v217
    %v219 = vrot.slane %v218, 2
    %v220 = vadd.f32 %v218, %v219
    %v221 = vrot.slane %v220, 1
    %v222 = vadd.f32 %v220, %v221
    %s223 = vtos %v222
    %s224 = sadd.f32 %s223, 0.001
    %s225 = smul.f32 %s194, 2.0
    %s226 = sadd.f32 %s209, %s224
    %v227 = vstv %s226
    %v228 = vrcp.pop %v227
    %v229 = vmul.f32 %v227, %v228
    %v230 = vsub.f32 1.0, %v229
    %v231 = vmul.f32 %v228, %v230
    %v232 = vadd.f32 %v228, %v231
    %vm233 = vweird.f32 %v227
    %vm234 = vweird.f32 %v228
    %vm235 = vmor %vm233, %vm234
    %v236 = vsel %vm235, %v228, %v232
    %v237 = vand.u32 2147483647, %v227
    %vm238 = vcmp.eq.f32.partialorder %v237, 8.507059e+37
    %v239 = vand.u32 %v227, 2147483648
    %v240 = vor.u32 1.1754944e-38, %v239
    %v241 = vsel %vm238, %v240, %v236
    %s242 = vtos %v241
    %s243 = smul.f32 %s225, %s242
    %s244 = ssub.f32 1.0, %s243
    %s245 = sadd.f32 %s244, 0.0
    %248 = vrot.lane.b32.xlu0 %v156, 1
    %v249 = vpop.permute.xlu0 %248
    %250 = vrot.lane.b32.xlu0 %v171, 1
    %v251 = vpop.permute.xlu0 %250
    %vm254 = vcmask 138248
    %255 = vst.msk [vmem:[#allocation2 + $0x1] sm:$0xff] %vm254, %v249
    %256 = vst.msk [vmem:[#allocation2 + $0x9] sm:$0xff] %vm254, %v251
    %259 = vrot.lane.b32.xlu0 %v178, 1
    %v260 = vpop.permute.xlu0 %259
    %261 = vrot.lane.b32.xlu0 %v179, 1
    %v262 = vpop.permute.xlu0 %261
    %265 = vst.msk [vmem:[#allocation3 + $0x1] sm:$0xff] %vm254, %v260
    %266 = vst.msk [vmem:[#allocation3 + $0x9] sm:$0xff] %vm254, %v262
    %v267 = vld [vmem:[#allocation2] sm:$0xff]
    %v268 = vld [vmem:[#allocation2 + $0x8] sm:$0xff]
    %v269 = vld [vmem:[#allocation2 + $0x10] sm:$0x3]
    %v270 = vadd.f32 %v267, 0.0
    %v271 = vadd.f32 %v268, 0.0
    %274 = vrot.lane.b32.xlu0 %v267, 127
    %v275 = vpop.permute.xlu0 %274
    %276 = vrot.lane.b32.xlu0 %v268, 127
    %v277 = vpop.permute.xlu0 %276
    %v280 = vadd.f32 %v270, %v275
    %v281 = vadd.f32 %v271, %v277
    %282 = vrot.lane.b32.xlu0 %v267, 126
    %v283 = vpop.permute.xlu0 %282
    %284 = vrot.lane.b32.xlu0 %v268, 126
    %v285 = vpop.permute.xlu0 %284
    %v288 = vadd.f32 %v280, %v283
    %v289 = vadd.f32 %v281, %v285
    %vm291 = vcmask 1046528
    %v292 = vrot.slane %v267, 1
    %v293 = vrot.slane %v268, 1
    %v294 = vsel %vm291, %v292, %v293
    %v295 = vrot.slane %v269, 1
    %v296 = vsel %vm291, %v293, %v295
    %v299 = vadd.f32 %v288, %v294
    %v300 = vadd.f32 %v289, %v296
    %301 = vrot.lane.b32.xlu0 %v294, 127
    %v302 = vpop.permute.xlu0 %301
    %303 = vrot.lane.b32.xlu0 %v296, 127
    %v304 = vpop.permute.xlu0 %303
    %v307 = vadd.f32 %v299, %v302
    %v308 = vadd.f32 %v300, %v304
    %309 = vrot.lane.b32.xlu0 %v294, 126
    %v310 = vpop.permute.xlu0 %309
    %311 = vrot.lane.b32.xlu0 %v296, 126
    %v312 = vpop.permute.xlu0 %311
    %v315 = vadd.f32 %v307, %v310
    %v316 = vadd.f32 %v308, %v312
    %vm317 = vcmask 1045504
    %v318 = vrot.slane %v267, 2
    %v319 = vrot.slane %v268, 2
    %v320 = vsel %vm317, %v318, %v319
    %v321 = vrot.slane %v269, 2
    %v322 = vsel %vm317, %v319, %v321
    %v325 = vadd.f32 %v315, %v320
    %v326 = vadd.f32 %v316, %v322
    %327 = vrot.lane.b32.xlu0 %v320, 127
    %v328 = vpop.permute.xlu0 %327
    %329 = vrot.lane.b32.xlu0 %v322, 127
    %v330 = vpop.permute.xlu0 %329
    %v333 = vadd.f32 %v325, %v328
    %v334 = vadd.f32 %v326, %v330
    %335 = vrot.lane.b32.xlu0 %v320, 126
    %v336 = vpop.permute.xlu0 %335
    %337 = vrot.lane.b32.xlu0 %v322, 126
    %v338 = vpop.permute.xlu0 %337
    %v341 = vadd.f32 %v333, %v336
    %v342 = vadd.f32 %v334, %v338
    %v343 = vmul.f32 %v267, 9.0
    %v344 = vmul.f32 %v268, 9.0
    %v345 = vmul.f32 %v269, 9.0
    %vm348 = vcmask 1040384
    %v349 = vrot.slane %v341, 7
    %v350 = vrot.slane %v342, 7
    %v351 = vsel %vm348, %v349, %v350
    %352 = vrot.lane.b32.xlu0 %v349, 1
    %v353 = vpop.permute.xlu0 %352
    %354 = vrot.lane.b32.xlu0 %v351, 1
    %v355 = vpop.permute.xlu0 %354
    %356 = vrot.lane.b32.xlu0 %v350, 1
    %v357 = vpop.permute.xlu0 %356
    %v361 = vsub.f32 %v343, %v353
    %v362 = vsub.f32 %v344, %v355
    %v363 = vsub.f32 %v345, %v357
    %v364 = vand.u32 2147483647, %v361
    %v365 = vand.u32 2147483647, %v362
    %v366 = vand.u32 2147483647, %v363
    %v367 = vld [vmem:[#allocation3] sm:$0xff]
    %v368 = vld [vmem:[#allocation3 + $0x8] sm:$0xff]
    %v369 = vld [vmem:[#allocation3 + $0x10] sm:$0x3]
    %v370 = vadd.f32 %v367, 0.0
    %v371 = vadd.f32 %v368, 0.0
    %374 = vrot.lane.b32.xlu0 %v367, 127
    %v375 = vpop.permute.xlu0 %374
    %376 = vrot.lane.b32.xlu0 %v368, 127
    %v377 = vpop.permute.xlu0 %376
    %v380 = vadd.f32 %v370, %v375
    %v381 = vadd.f32 %v371, %v377
    %382 = vrot.lane.b32.xlu0 %v367, 126
    %v383 = vpop.permute.xlu0 %382
    %384 = vrot.lane.b32.xlu0 %v368, 126
    %v385 = vpop.permute.xlu0 %384
    %v388 = vadd.f32 %v380, %v383
    %v389 = vadd.f32 %v381, %v385
    %v391 = vrot.slane %v367, 1
    %v392 = vrot.slane %v368, 1
    %v393 = vsel %vm291, %v391, %v392
    %v394 = vrot.slane %v369, 1
    %v395 = vsel %vm291, %v392, %v394
    %v398 = vadd.f32 %v388, %v393
    %v399 = vadd.f32 %v389, %v395
    %400 = vrot.lane.b32.xlu0 %v393, 127
    %v401 = vpop.permute.xlu0 %400
    %402 = vrot.lane.b32.xlu0 %v395, 127
    %v403 = vpop.permute.xlu0 %402
    %v406 = vadd.f32 %v398, %v401
    %v407 = vadd.f32 %v399, %v403
    %408 = vrot.lane.b32.xlu0 %v393, 126
    %v409 = vpop.permute.xlu0 %408
    %410 = vrot.lane.b32.xlu0 %v395, 126
    %v411 = vpop.permute.xlu0 %410
    %v414 = vadd.f32 %v406, %v409
    %v415 = vadd.f32 %v407, %v411
    %v416 = vrot.slane %v367, 2
    %v417 = vrot.slane %v368, 2
    %v418 = vsel %vm317, %v416, %v417
    %v419 = vrot.slane %v369, 2
    %v420 = vsel %vm317, %v417, %v419
    %v423 = vadd.f32 %v414, %v418
    %v424 = vadd.f32 %v415, %v420
    %425 = vrot.lane.b32.xlu0 %v418, 127
    %v426 = vpop.permute.xlu0 %425
    %427 = vrot.lane.b32.xlu0 %v420, 127
    %v428 = vpop.permute.xlu0 %427
    %v431 = vadd.f32 %v423, %v426
    %v432 = vadd.f32 %v424, %v428
    %433 = vrot.lane.b32.xlu0 %v418, 126
    %v434 = vpop.permute.xlu0 %433
    %435 = vrot.lane.b32.xlu0 %v420, 126
    %v436 = vpop.permute.xlu0 %435
    %v439 = vadd.f32 %v431, %v434
    %v440 = vadd.f32 %v432, %v436
    %v441 = vmul.f32 %v367, 9.0
    %v442 = vmul.f32 %v368, 9.0
    %v443 = vmul.f32 %v369, 9.0
    %v446 = vrot.slane %v439, 7
    %v447 = vrot.slane %v440, 7
    %v448 = vsel %vm348, %v446, %v447
    %449 = vrot.lane.b32.xlu0 %v446, 1
    %v450 = vpop.permute.xlu0 %449
    %451 = vrot.lane.b32.xlu0 %v448, 1
    %v452 = vpop.permute.xlu0 %451
    %453 = vrot.lane.b32.xlu0 %v447, 1
    %v454 = vpop.permute.xlu0 %453
    %v458 = vsub.f32 %v441, %v450
    %v459 = vsub.f32 %v442, %v452
    %v460 = vsub.f32 %v443, %v454
    %v461 = vand.u32 2147483647, %v458
    %v462 = vand.u32 2147483647, %v459
    %v463 = vand.u32 2147483647, %v460
    %vm464 = vcmp.ge.f32.partialorder %v364, 0.5
    %vm465 = vcmp.ge.f32.partialorder %v365, 0.5
    %vm466 = vcmp.ge.f32.partialorder %v366, 0.5
    %v467 = vsel %vm464, 1, 0
    %v468 = vsel %vm465, 1, 0
    %v469 = vsel %vm466, 1, 0
    %v470 = vcvt.s32.f32 %v467
    %v471 = vcvt.s32.f32 %v468
    %v472 = vcvt.s32.f32 %v469
    %v473 = vsub.f32 %v364, %v461
    %v474 = vsub.f32 %v365, %v462
    %v475 = vsub.f32 %v366, %v463
    %v476 = vmul.f32 %v470, %v473
    %v477 = vmul.f32 %v471, %v474
    %v478 = vmul.f32 %v472, %v475
    %v479 = vmul.f32 %v476, %v473
    %v480 = vmul.f32 %v477, %v474
    %v481 = vmul.f32 %v478, %v475
    %v485 = vrot.slane %v479, 1
    %v486 = vrot.slane %v480, 1
    %v487 = vsel %vm291, %v485, %v486
    %v488 = vrot.slane %v481, 1
    %v489 = vsel %vm291, %v486, %v488
    %490 = vrot.lane.b32.xlu0 %v487, 127
    %v491 = vpop.permute.xlu0 %490
    %492 = vrot.lane.b32.xlu0 %v489, 127
    %v493 = vpop.permute.xlu0 %492
    %v496 = vsel %vm182, %v491, 0.0
    %v497 = vsel %vm182, %v493, 0.0
    %v498 = vadd.f32 %v496, %v497
    %499 = vadd.xlane.f32.xlu0 %v498
    %v500 = vpop.xlane.xlu0 %499
    %v501 = vrot.slane %v500, 4
    %v502 = vadd.f32 %v500, %v501
    %v503 = vrot.slane %v502, 2
    %v504 = vadd.f32 %v502, %v503
    %v505 = vrot.slane %v504, 1
    %v506 = vadd.f32 %v504, %v505
    %s507 = vtos %v506
    %s508 = sadd.f32 %s507, 0.0
    %v512 = vrot.slane %v470, 1
    %v513 = vrot.slane %v471, 1
    %v514 = vsel %vm291, %v512, %v513
    %v515 = vrot.slane %v472, 1
    %v516 = vsel %vm291, %v513, %v515
    %517 = vrot.lane.b32.xlu0 %v514, 127
    %v518 = vpop.permute.xlu0 %517
    %519 = vrot.lane.b32.xlu0 %v516, 127
    %v520 = vpop.permute.xlu0 %519
    %v523 = vsel %vm182, %v518, 0.0
    %v524 = vsel %vm182, %v520, 0.0
    %v525 = vadd.f32 %v523, %v524
    %526 = vadd.xlane.f32.xlu0 %v525
    %v527 = vpop.xlane.xlu0 %526
    %v528 = vrot.slane %v527, 4
    %v529 = vadd.f32 %v527, %v528
    %v530 = vrot.slane %v529, 2
    %v531 = vadd.f32 %v529, %v530
    %v532 = vrot.slane %v531, 1
    %v533 = vadd.f32 %v531, %v532
    %s534 = vtos %v533
    %s535 = sadd.f32 %s534, 0.0
    %s536 = sld [smem:[#allocation4 + $0x80]]
    %v537 = vstv %s536
    %v538 = vmul.f32 %v537, %v64
    %v539 = vmul.f32 %v537, %v65
    %s540 = sld [smem:[#allocation4 + $0x81]]
    %v541 = vstv %s540
    %v542 = vmul.f32 %v541, %v66
    %v543 = vmul.f32 %v541, %v67
    %v544 = vadd.f32 %v538, %v542
    %v545 = vadd.f32 %v539, %v543
    %s546 = sld [smem:[#allocation4 + $0x82]]
    %v547 = vstv %s546
    %v548 = vmul.f32 %v547, %v68
    %v549 = vmul.f32 %v547, %v69
    %v550 = vadd.f32 %v544, %v548
    %v551 = vadd.f32 %v545, %v549
    %s552 = sld [smem:[#allocation4 + $0x83]]
    %v553 = vstv %s552
    %v554 = vmul.f32 %v553, %v70
    %v555 = vmul.f32 %v553, %v71
    %v556 = vadd.f32 %v550, %v554
    %v557 = vadd.f32 %v551, %v555
    %s558 = sld [smem:[#allocation4 + $0x84]]
    %v559 = vstv %s558
    %v560 = vmul.f32 %v559, %v72
    %v561 = vmul.f32 %v559, %v73
    %v562 = vadd.f32 %v556, %v560
    %v563 = vadd.f32 %v557, %v561
    %s564 = sld [smem:[#allocation4 + $0x85]]
    %v565 = vstv %s564
    %v566 = vmul.f32 %v565, %v74
    %v567 = vmul.f32 %v565, %v75
    %v568 = vadd.f32 %v562, %v566
    %v569 = vadd.f32 %v563, %v567
    %s570 = sld [smem:[#allocation4 + $0x86]]
    %v571 = vstv %s570
    %v572 = vmul.f32 %v571, %v76
    %v573 = vmul.f32 %v571, %v77
    %v574 = vadd.f32 %v568, %v572
    %v575 = vadd.f32 %v569, %v573
    %s576 = sld [smem:[#allocation4 + $0x87]]
    %v577 = vstv %s576
    %v578 = vmul.f32 %v577, %v78
    %v579 = vmul.f32 %v577, %v79
    %v580 = vadd.f32 %v574, %v578
    %v581 = vadd.f32 %v575, %v579
    %v582 = vxor.u32 %v580, 2147483648
    %v583 = vxor.u32 %v581, 2147483648
    %v584 = vmul.f32 %v582, 1.442695
    %v585 = vpow.pop %v584
    %v586 = vmul.f32 %v583, 1.442695
    %v587 = vpow.pop %v586
    %v588 = vadd.f32 %v585, 1.0
    %v589 = vadd.f32 %v587, 1.0
    %v590 = vrcp.pop %v588
    %v591 = vmul.f32 %v588, %v590
    %v592 = vsub.f32 1.0, %v591
    %v593 = vmul.f32 %v590, %v592
    %v594 = vadd.f32 %v590, %v593
    %vm595 = vweird.f32 %v588
    %vm596 = vweird.f32 %v590
    %vm597 = vmor %vm595, %vm596
    %v598 = vsel %vm597, %v590, %v594
    %v599 = vand.u32 2147483647, %v588
    %vm600 = vcmp.eq.f32.partialorder %v599, 8.507059e+37
    %v601 = vand.u32 %v588, 2147483648
    %v602 = vor.u32 1.1754944e-38, %v601
    %v603 = vsel %vm600, %v602, %v598
    %v604 = vmul.f32 1.0, %v603
    %v605 = vrcp.pop %v589
    %v606 = vmul.f32 %v589, %v605
    %v607 = vsub.f32 1.0, %v606
    %v608 = vmul.f32 %v605, %v607
    %v609 = vadd.f32 %v605, %v608
    %vm610 = vweird.f32 %v589
    %vm611 = vweird.f32 %v605
    %vm612 = vmor %vm610, %vm611
    %v613 = vsel %vm612, %v605, %v609
    %v614 = vand.u32 2147483647, %v589
    %vm615 = vcmp.eq.f32.partialorder %v614, 8.507059e+37
    %v616 = vand.u32 %v589, 2147483648
    %v617 = vor.u32 1.1754944e-38, %v616
    %v618 = vsel %vm615, %v617, %v613
    %v619 = vmul.f32 1.0, %v618
    %s620 = scalar_lea.vmem [#allocation9], 4
    %v621 = vld [vmem:[%s620] sm:$0x3]
    %v622 = vld [vmem:[%s620 + $0x2] sm:$0x3]
    %v623 = vunpack.c.0.s8 %v621
    %v624 = vunpack.c.0.s8 %v622
    %v625 = vand.u32 %v623, 255
    %v626 = vand.u32 %v624, 255
    %v627 = vcvt.s32.f32 %v625
    %v628 = vcvt.s32.f32 %v626
    %v629 = vmul.f32 %v604, %v627
    %v630 = vmul.f32 %v619, %v628
    %v631 = vsel %vm182, %v629, 0.0
    %v632 = vsel %vm182, %v630, 0.0
    %v633 = vadd.f32 %v631, %v632
    %634 = vadd.xlane.f32.xlu0 %v633
    %v635 = vpop.xlane.xlu0 %634
    %v636 = vrot.slane %v635, 4
    %v637 = vadd.f32 %v635, %v636
    %v638 = vrot.slane %v637, 2
    %v639 = vadd.f32 %v637, %v638
    %v640 = vrot.slane %v639, 1
    %v641 = vadd.f32 %v639, %v640
    %s642 = vtos %v641
    %v643 = vmul.f32 %v604, %v604
    %v644 = vmul.f32 %v619, %v619
    %v645 = vsel %vm182, %v643, 0.0
    %v646 = vsel %vm182, %v644, 0.0
    %v647 = vadd.f32 %v645, %v646
    %648 = vadd.xlane.f32.xlu0 %v647
    %v649 = vpop.xlane.xlu0 %648
    %v650 = vrot.slane %v649, 4
    %v651 = vadd.f32 %v649, %v650
    %v652 = vrot.slane %v651, 2
    %v653 = vadd.f32 %v651, %v652
    %v654 = vrot.slane %v653, 1
    %v655 = vadd.f32 %v653, %v654
    %s656 = vtos %v655
    %s657 = sadd.f32 %s656, 0.001
    %v658 = vmul.f32 %v627, %v627
    %v659 = vmul.f32 %v628, %v628
    %v660 = vsel %vm182, %v658, 0.0
    %v661 = vsel %vm182, %v659, 0.0
    %v662 = vadd.f32 %v660, %v661
    %663 = vadd.xlane.f32.xlu0 %v662
    %v664 = vpop.xlane.xlu0 %663
    %v665 = vrot.slane %v664, 4
    %v666 = vadd.f32 %v664, %v665
    %v667 = vrot.slane %v666, 2
    %v668 = vadd.f32 %v666, %v667
    %v669 = vrot.slane %v668, 1
    %v670 = vadd.f32 %v668, %v669
    %s671 = vtos %v670
    %s672 = sadd.f32 %s671, 0.001
    %s673 = smul.f32 %s642, 2.0
    %s674 = sadd.f32 %s657, %s672
    %v675 = vstv %s674
    %v676 = vrcp.pop %v675
    %v677 = vmul.f32 %v675, %v676
    %v678 = vsub.f32 1.0, %v677
    %v679 = vmul.f32 %v676, %v678
    %v680 = vadd.f32 %v676, %v679
    %vm681 = vweird.f32 %v675
    %vm682 = vweird.f32 %v676
    %vm683 = vmor %vm681, %vm682
    %v684 = vsel %vm683, %v676, %v680
    %v685 = vand.u32 2147483647, %v675
    %vm686 = vcmp.eq.f32.partialorder %v685, 8.507059e+37
    %v687 = vand.u32 %v675, 2147483648
    %v688 = vor.u32 1.1754944e-38, %v687
    %v689 = vsel %vm686, %v688, %v684
    %s690 = vtos %v689
    %s691 = smul.f32 %s673, %s690
    %s692 = ssub.f32 1.0, %s691
    %s693 = sadd.f32 %s245, %s692
    %696 = vrot.lane.b32.xlu0 %v604, 1
    %v697 = vpop.permute.xlu0 %696
    %698 = vrot.lane.b32.xlu0 %v619, 1
    %v699 = vpop.permute.xlu0 %698
    %702 = vst.msk [vmem:[#allocation2 + $0x1] sm:$0xff] %vm254, %v697
    %703 = vst.msk [vmem:[#allocation2 + $0x9] sm:$0xff] %vm254, %v699
    %706 = vrot.lane.b32.xlu0 %v627, 1
    %v707 = vpop.permute.xlu0 %706
    %708 = vrot.lane.b32.xlu0 %v628, 1
    %v709 = vpop.permute.xlu0 %708
    %712 = vst.msk [vmem:[#allocation3 + $0x1] sm:$0xff] %vm254, %v707
    %713 = vst.msk [vmem:[#allocation3 + $0x9] sm:$0xff] %vm254, %v709
    %v714 = vld [vmem:[#allocation2] sm:$0xff]
    %v715 = vld [vmem:[#allocation2 + $0x8] sm:$0xff]
    %v716 = vld [vmem:[#allocation2 + $0x10] sm:$0x3]
    %v717 = vadd.f32 %v714, 0.0
    %v718 = vadd.f32 %v715, 0.0
    %721 = vrot.lane.b32.xlu0 %v714, 127
    %v722 = vpop.permute.xlu0 %721
    %723 = vrot.lane.b32.xlu0 %v715, 127
    %v724 = vpop.permute.xlu0 %723
    %v727 = vadd.f32 %v717, %v722
    %v728 = vadd.f32 %v718, %v724
    %729 = vrot.lane.b32.xlu0 %v714, 126
    %v730 = vpop.permute.xlu0 %729
    %731 = vrot.lane.b32.xlu0 %v715, 126
    %v732 = vpop.permute.xlu0 %731
    %v735 = vadd.f32 %v727, %v730
    %v736 = vadd.f32 %v728, %v732
    %v738 = vrot.slane %v714, 1
    %v739 = vrot.slane %v715, 1
    %v740 = vsel %vm291, %v738, %v739
    %v741 = vrot.slane %v716, 1
    %v742 = vsel %vm291, %v739, %v741
    %v745 = vadd.f32 %v735, %v740
    %v746 = vadd.f32 %v736, %v742
    %747 = vrot.lane.b32.xlu0 %v740, 127
    %v748 = vpop.permute.xlu0 %747
    %749 = vrot.lane.b32.xlu0 %v742, 127
    %v750 = vpop.permute.xlu0 %749
    %v753 = vadd.f32 %v745, %v748
    %v754 = vadd.f32 %v746, %v750
    %755 = vrot.lane.b32.xlu0 %v740, 126
    %v756 = vpop.permute.xlu0 %755
    %757 = vrot.lane.b32.xlu0 %v742, 126
    %v758 = vpop.permute.xlu0 %757
    %v761 = vadd.f32 %v753, %v756
    %v762 = vadd.f32 %v754, %v758
    %v763 = vrot.slane %v714, 2
    %v764 = vrot.slane %v715, 2
    %v765 = vsel %vm317, %v763, %v764
    %v766 = vrot.slane %v716, 2
    %v767 = vsel %vm317, %v764, %v766
    %v770 = vadd.f32 %v761, %v765
    %v771 = vadd.f32 %v762, %v767
    %772 = vrot.lane.b32.xlu0 %v765, 127
    %v773 = vpop.permute.xlu0 %772
    %774 = vrot.lane.b32.xlu0 %v767, 127
    %v775 = vpop.permute.xlu0 %774
    %v778 = vadd.f32 %v770, %v773
    %v779 = vadd.f32 %v771, %v775
    %780 = vrot.lane.b32.xlu0 %v765, 126
    %v781 = vpop.permute.xlu0 %780
    %782 = vrot.lane.b32.xlu0 %v767, 126
    %v783 = vpop.permute.xlu0 %782
    %v786 = vadd.f32 %v778, %v781
    %v787 = vadd.f32 %v779, %v783
    %v788 = vmul.f32 %v714, 9.0
    %v789 = vmul.f32 %v715, 9.0
    %v790 = vmul.f32 %v716, 9.0
    %v793 = vrot.slane %v786, 7
    %v794 = vrot.slane %v787, 7
    %v795 = vsel %vm348, %v793, %v794
    %796 = vrot.lane.b32.xlu0 %v793, 1
    %v797 = vpop.permute.xlu0 %796
    %798 = vrot.lane.b32.xlu0 %v795, 1
    %v799 = vpop.permute.xlu0 %798
    %800 = vrot.lane.b32.xlu0 %v794, 1
    %v801 = vpop.permute.xlu0 %800
    %v805 = vsub.f32 %v788, %v797
    %v806 = vsub.f32 %v789, %v799
    %v807 = vsub.f32 %v790, %v801
    %v808 = vand.u32 2147483647, %v805
    %v809 = vand.u32 2147483647, %v806
    %v810 = vand.u32 2147483647, %v807
    %v811 = vld [vmem:[#allocation3] sm:$0xff]
    %v812 = vld [vmem:[#allocation3 + $0x8] sm:$0xff]
    %v813 = vld [vmem:[#allocation3 + $0x10] sm:$0x3]
    %v814 = vadd.f32 %v811, 0.0
    %v815 = vadd.f32 %v812, 0.0
    %818 = vrot.lane.b32.xlu0 %v811, 127
    %v819 = vpop.permute.xlu0 %818
    %820 = vrot.lane.b32.xlu0 %v812, 127
    %v821 = vpop.permute.xlu0 %820
    %v824 = vadd.f32 %v814, %v819
    %v825 = vadd.f32 %v815, %v821
    %826 = vrot.lane.b32.xlu0 %v811, 126
    %v827 = vpop.permute.xlu0 %826
    %828 = vrot.lane.b32.xlu0 %v812, 126
    %v829 = vpop.permute.xlu0 %828
    %v832 = vadd.f32 %v824, %v827
    %v833 = vadd.f32 %v825, %v829
    %v835 = vrot.slane %v811, 1
    %v836 = vrot.slane %v812, 1
    %v837 = vsel %vm291, %v835, %v836
    %v838 = vrot.slane %v813, 1
    %v839 = vsel %vm291, %v836, %v838
    %v842 = vadd.f32 %v832, %v837
    %v843 = vadd.f32 %v833, %v839
    %844 = vrot.lane.b32.xlu0 %v837, 127
    %v845 = vpop.permute.xlu0 %844
    %846 = vrot.lane.b32.xlu0 %v839, 127
    %v847 = vpop.permute.xlu0 %846
    %v850 = vadd.f32 %v842, %v845
    %v851 = vadd.f32 %v843, %v847
    %852 = vrot.lane.b32.xlu0 %v837, 126
    %v853 = vpop.permute.xlu0 %852
    %854 = vrot.lane.b32.xlu0 %v839, 126
    %v855 = vpop.permute.xlu0 %854
    %v858 = vadd.f32 %v850, %v853
    %v859 = vadd.f32 %v851, %v855
    %v860 = vrot.slane %v811, 2
    %v861 = vrot.slane %v812, 2
    %v862 = vsel %vm317, %v860, %v861
    %v863 = vrot.slane %v813, 2
    %v864 = vsel %vm317, %v861, %v863
    %v867 = vadd.f32 %v858, %v862
    %v868 = vadd.f32 %v859, %v864
    %869 = vrot.lane.b32.xlu0 %v862, 127
    %v870 = vpop.permute.xlu0 %869
    %871 = vrot.lane.b32.xlu0 %v864, 127
    %v872 = vpop.permute.xlu0 %871
    %v875 = vadd.f32 %v867, %v870
    %v876 = vadd.f32 %v868, %v872
    %877 = vrot.lane.b32.xlu0 %v862, 126
    %v878 = vpop.permute.xlu0 %877
    %879 = vrot.lane.b32.xlu0 %v864, 126
    %v880 = vpop.permute.xlu0 %879
    %v883 = vadd.f32 %v875, %v878
    %v884 = vadd.f32 %v876, %v880
    %v885 = vmul.f32 %v811, 9.0
    %v886 = vmul.f32 %v812, 9.0
    %v887 = vmul.f32 %v813, 9.0
    %v890 = vrot.slane %v883, 7
    %v891 = vrot.slane %v884, 7
    %v892 = vsel %vm348, %v890, %v891
    %893 = vrot.lane.b32.xlu0 %v890, 1
    %v894 = vpop.permute.xlu0 %893
    %895 = vrot.lane.b32.xlu0 %v892, 1
    %v896 = vpop.permute.xlu0 %895
    %897 = vrot.lane.b32.xlu0 %v891, 1
    %v898 = vpop.permute.xlu0 %897
    %v902 = vsub.f32 %v885, %v894
    %v903 = vsub.f32 %v886, %v896
    %v904 = vsub.f32 %v887, %v898
    %v905 = vand.u32 2147483647, %v902
    %v906 = vand.u32 2147483647, %v903
    %v907 = vand.u32 2147483647, %v904
    %vm908 = vcmp.ge.f32.partialorder %v808, 0.5
    %vm909 = vcmp.ge.f32.partialorder %v809, 0.5
    %vm910 = vcmp.ge.f32.partialorder %v810, 0.5
    %v911 = vsel %vm908, 1, 0
    %v912 = vsel %vm909, 1, 0
    %v913 = vsel %vm910, 1, 0
    %v914 = vcvt.s32.f32 %v911
    %v915 = vcvt.s32.f32 %v912
    %v916 = vcvt.s32.f32 %v913
    %v917 = vsub.f32 %v808, %v905
    %v918 = vsub.f32 %v809, %v906
    %v919 = vsub.f32 %v810, %v907
    %v920 = vmul.f32 %v914, %v917
    %v921 = vmul.f32 %v915, %v918
    %v922 = vmul.f32 %v916, %v919
    %v923 = vmul.f32 %v920, %v917
    %v924 = vmul.f32 %v921, %v918
    %v925 = vmul.f32 %v922, %v919
    %v929 = vrot.slane %v923, 1
    %v930 = vrot.slane %v924, 1
    %v931 = vsel %vm291, %v929, %v930
    %v932 = vrot.slane %v925, 1
    %v933 = vsel %vm291, %v930, %v932
    %934 = vrot.lane.b32.xlu0 %v931, 127
    %v935 = vpop.permute.xlu0 %934
    %936 = vrot.lane.b32.xlu0 %v933, 127
    %v937 = vpop.permute.xlu0 %936
    %v940 = vsel %vm182, %v935, 0.0
    %v941 = vsel %vm182, %v937, 0.0
    %v942 = vadd.f32 %v940, %v941
    %943 = vadd.xlane.f32.xlu0 %v942
    %v944 = vpop.xlane.xlu0 %943
    %v945 = vrot.slane %v944, 4
    %v946 = vadd.f32 %v944, %v945
    %v947 = vrot.slane %v946, 2
    %v948 = vadd.f32 %v946, %v947
    %v949 = vrot.slane %v948, 1
    %v950 = vadd.f32 %v948, %v949
    %s951 = vtos %v950
    %s952 = sadd.f32 %s508, %s951
    %v956 = vrot.slane %v914, 1
    %v957 = vrot.slane %v915, 1
    %v958 = vsel %vm291, %v956, %v957
    %v959 = vrot.slane %v916, 1
    %v960 = vsel %vm291, %v957, %v959
    %961 = vrot.lane.b32.xlu0 %v958, 127
    %v962 = vpop.permute.xlu0 %961
    %963 = vrot.lane.b32.xlu0 %v960, 127
    %v964 = vpop.permute.xlu0 %963
    %v967 = vsel %vm182, %v962, 0.0
    %v968 = vsel %vm182, %v964, 0.0
    %v969 = vadd.f32 %v967, %v968
    %970 = vadd.xlane.f32.xlu0 %v969
    %v971 = vpop.xlane.xlu0 %970
    %v972 = vrot.slane %v971, 4
    %v973 = vadd.f32 %v971, %v972
    %v974 = vrot.slane %v973, 2
    %v975 = vadd.f32 %v973, %v974
    %v976 = vrot.slane %v975, 1
    %v977 = vadd.f32 %v975, %v976
    %s978 = vtos %v977
    %s979 = sadd.f32 %s535, %s978
    %v980 = vstv %s693
    %vm981 = vcmask 0
    %982 = vst.msk [vmem:[#allocation11] sm:$0x1] %vm981, %v980
    %v983 = vstv %s952
    %984 = vst.msk [vmem:[#allocation12] sm:$0x1] %vm981, %v983
    %v985 = vstv %s979
    %986 = vst.msk [vmem:[#allocation14] sm:$0x1] %vm981, %v985
    // Predicated region
    $region26: #{tpu_custom_call.1} parent=1 // pred_check
      _
    $region27: #{tpu_custom_call.1} parent=1 // pred_check_branch
      %988 = sbr.rel (0) target = $region29
    $region28: #{tpu_custom_call.1} parent=1 // pred_region
      %990 = vsyncadd [#allocation6], 0
      %s992 = sshll.u32 [#allocation11], 4
      %s993 = int_to_ptr.vmem [resolvable:$true] %s992
      %s994 = sshll.u32 %s3, 4
      %s995 = int_to_ptr.hbm [resolvable:$true] %s994
      %997 = dma.vmem_to_hbm [thread:$0]  %s993, 16, %s995, [#allocation6]
    $region29: #{tpu_custom_call.1} parent=1 // pred_fallthru
      _
    // Predicated region
    $region30: #{tpu_custom_call.1} parent=1 // pred_check
      _
    $region31: #{tpu_custom_call.1} parent=1 // pred_check_branch
      %999 = sbr.rel (0) target = $region33
    $region32: #{tpu_custom_call.1} parent=1 // pred_region
      %1001 = vsyncadd [#allocation13], 0
      %s1003 = sshll.u32 [#allocation12], 4
      %s1004 = int_to_ptr.vmem [resolvable:$true] %s1003
      %s1005 = sshll.u32 %s4, 4
      %s1006 = int_to_ptr.hbm [resolvable:$true] %s1005
      %1008 = dma.vmem_to_hbm [thread:$0]  %s1004, 16, %s1006, [#allocation13]
    $region33: #{tpu_custom_call.1} parent=1 // pred_fallthru
      _
    // Predicated region
    $region34: #{tpu_custom_call.1} parent=1 // pred_check
      _
    $region35: #{tpu_custom_call.1} parent=1 // pred_check_branch
      %1010 = sbr.rel (0) target = $region37
    $region36: #{tpu_custom_call.1} parent=1 // pred_region
      %1012 = vsyncadd [#allocation13], 0
      %s1014 = sshll.u32 [#allocation14], 4
      %s1015 = int_to_ptr.vmem [resolvable:$true] %s1014
      %s1016 = sshll.u32 %s5, 4
      %s1017 = int_to_ptr.hbm [resolvable:$true] %s1016
      %1019 = dma.vmem_to_hbm [thread:$0]  %s1015, 16, %s1017, [#allocation13]
    $region37: #{tpu_custom_call.1} parent=1 // pred_fallthru
      _
    // Predicated region
    $region38: #{tpu_custom_call.1} parent=1 // pred_check
      _
    $region39: #{tpu_custom_call.1} parent=1 // pred_check_branch
      %1021 = sbr.rel (0) target = $region41
    $region40: #{tpu_custom_call.1} parent=1 // pred_region
      %1023 = dma.done [#allocation6], 16
    $region41: #{tpu_custom_call.1} parent=1 // pred_fallthru
      _
    // Predicated region
    $region42: #{tpu_custom_call.1} parent=1 // pred_check
      _
    $region43: #{tpu_custom_call.1} parent=1 // pred_check_branch
      %1025 = sbr.rel (0) target = $region45
    $region44: #{tpu_custom_call.1} parent=1 // pred_region
      %1027 = dma.done [#allocation13], 16
    $region45: #{tpu_custom_call.1} parent=1 // pred_fallthru
      _
    // Predicated region
    $region46: #{tpu_custom_call.1} parent=1 // pred_check
      _
    $region47: #{tpu_custom_call.1} parent=1 // pred_check_branch
      %1029 = sbr.rel (0) target = $region49
    $region48: #{tpu_custom_call.1} parent=1 // pred_region
      %1031 = dma.done [#allocation13], 16
    $region49: #{tpu_custom_call.1} parent=1 // pred_fallthru
      _
    %1032 = vsyncpa [#allocation5], 1
    %1033 = vsyncpa [#allocation10], 1
    %1034 = vsyncpa [#allocation6], 1
    %1035 = vsyncpa [#allocation13], 1
    %1036 = vsyncpa [#allocation7], 1

</llo_original>
